<compile_context>
chip_gen: v7x
topology: tpu7x:2x2x1
jax: 0.10.0
libtpu: 0.0.40
codegen_flags: <defaults>
</compile_context>

<pallas_src>
import math

import jax
import jax.numpy as jnp
from jax import lax
from jax.experimental import pallas as pl
from jax.experimental.pallas import tpu as pltpu

# ----------------------------- config --------------------------------------
B = 2          # batch
T = 8          # sequence length (<= ctx_size)
D = 32         # dmodel
H = 4          # num_heads
DFF = 4 * D    # dim_feedforward
EPS = 1e-5     # layernorm eps

# width of the packed bias/LN table rows (one lane-tile wide at these shapes)
PACK_W = max(128, ((max(3 * D, DFF) + 127) // 128) * 128)


def _new_gelu(x):
    # 0.5 * x * (1 + tanh(sqrt(2/pi) * (x + 0.044715 * x^3)))
    return 0.5 * x * (1.0 + jnp.tanh(math.sqrt(2.0 / math.pi)
                                     * (x + 0.044715 * x * x * x)))


def _layernorm(x, gamma, beta, eps):
    mu = jnp.mean(x, axis=-1, keepdims=True)
    xc = x - mu
    var = jnp.mean(xc * xc, axis=-1, keepdims=True)
    inv = lax.rsqrt(var + eps)          # EUP path
    return xc * inv * gamma + beta


def gpt_block_kernel(x_ref,            # (1, T, D)   f32
                     w_attn_ref,       # (D, 3D)     bf16 (Q columns pre-scaled)
                     w_aproj_ref,      # (H, dh, D)  bf16 (c_proj split per head)
                     w_fc_ref,         # (D, DFF)    bf16
                     w_mproj_ref,      # (DFF, D)    bf16
                     tab_ref,          # (8, PACK_W) f32 packed biases + LN params
                     o_ref):           # (1, T, D)
    f32, bf16 = jnp.float32, jnp.bfloat16
    x = x_ref[0].astype(f32)                       # (T, D)
    t, d = x.shape
    dh = d // H

    # -- unpack the bias / LayerNorm table (static sublane/lane slices) ------
    tab = tab_ref[...]                             # (8, PACK_W)
    b_attn = tab[0:1, :3 * d]                      # (1, 3D)
    b_ap   = tab[1:2, :d]
    g1     = tab[2:3, :d]
    bt1    = tab[3:4, :d]
    b_fc   = tab[4:5, :DFF]
    b_mp   = tab[5:6, :d]
    g2     = tab[6:7, :d]
    bt2    = tab[7:8, :d]

    # ---- attention ---------------------------------------------------------
    # qkv projection: bf16 MXU operands, f32 accumulation. 1/sqrt(dh) is
    # already folded into the Q slice of w_attn (done once at param prep).
    qkv = jnp.dot(x.astype(bf16), w_attn_ref[...],
                  preferred_element_type=f32) + b_attn          # (T, 3D)

    # Heads stacked on a leading batch axis -> one batched dot per stage
    # (replaces the H-way Python loop + lane-axis concatenate).
    q3 = jnp.stack([qkv[:, h * dh:(h + 1) * dh] for h in range(H)], axis=0)
    k3 = jnp.stack([qkv[:, d + h * dh: d + (h + 1) * dh] for h in range(H)], axis=0)
    v3 = jnp.stack([qkv[:, 2 * d + h * dh: 2 * d + (h + 1) * dh] for h in range(H)], axis=0)
    # q3/k3/v3: (H, T, dh)

    # scores / probs kept in f32 (tiny tiles, not weight-bound; exact softmax).
    s = jnp.einsum('hqc,hkc->hqk', q3, k3,
                   preferred_element_type=f32)                  # (H, T, T)

    # causal mask: single select (masked logits are exactly -10000, as in ref)
    rows = lax.broadcasted_iota(jnp.int32, (1, t, t), 1)
    cols = lax.broadcasted_iota(jnp.int32, (1, t, t), 2)
    s = jnp.where(cols <= rows, s, -10000.0)

    s = s - jnp.max(s, axis=-1, keepdims=True)
    p = jnp.exp(s)
    p = p * pl.reciprocal(jnp.sum(p, axis=-1, keepdims=True), approx=True)

    o3 = jnp.einsum('hqk,hkc->hqc', p, v3,
                    preferred_element_type=f32)                 # (H, T, dh)

    # per-head output projection summed over heads == merge_heads + c_proj,
    # but with no lane-axis concatenate.
    a = jnp.einsum('hqc,hcn->hqn', o3.astype(bf16), w_aproj_ref[...],
                   preferred_element_type=f32).sum(axis=0) + b_ap   # (T, D)

    # ---- residual + ln_1 ---------------------------------------------------
    x1 = _layernorm(x + a, g1, bt1, EPS)

    # ---- MLP (bf16 MXU operands, f32 elementwise GELU) ---------------------
    hmid = jnp.dot(x1.astype(bf16), w_fc_ref[...],
                   preferred_element_type=f32) + b_fc           # (T, DFF)
    hmid = _new_gelu(hmid)
    m = jnp.dot(hmid.astype(bf16), w_mproj_ref[...],
                preferred_element_type=f32) + b_mp              # (T, D)

    # ---- residual + ln_2 ---------------------------------------------------
    out = _layernorm(x1 + m, g2, bt2, EPS)
    o_ref[0] = out.astype(o_ref.dtype)


def prepare_params(p):
    """One-time parameter transform (outside the kernel, not per call)."""
    dh = D // H
    scale = 1.0 / math.sqrt(dh)
    # fold attention scale into the Q columns of c_attn
    w_attn = jnp.concatenate([p["w_attn"][:, :D] * scale, p["w_attn"][:, D:]],
                             axis=1)
    # c_proj weight split per head: (D, D) -> (H, dh, D)
    w_aproj3 = p["w_aproj"].reshape(H, dh, D)

    # pack all small vectors into one (8, PACK_W) f32 table (one DMA, one tile)
    tab = jnp.zeros((8, PACK_W), jnp.float32)
    tab = tab.at[0, :3 * D].set(p["b_attn"])
    tab = tab.at[1, :D].set(p["b_aproj"])
    tab = tab.at[2, :D].set(p["ln1_w"])
    tab = tab.at[3, :D].set(p["ln1_b"])
    tab = tab.at[4, :DFF].set(p["b_fc"])
    tab = tab.at[5, :D].set(p["b_mproj"])
    tab = tab.at[6, :D].set(p["ln2_w"])
    tab = tab.at[7, :D].set(p["ln2_b"])

    bf16 = jnp.bfloat16
    return {
        "w_attn":   w_attn.astype(bf16),
        "w_aproj3": w_aproj3.astype(bf16),
        "w_fc":     p["w_fc"].astype(bf16),
        "w_mproj":  p["w_mproj"].astype(bf16),
        "tab":      tab,
    }


def gpt_block(x, prep):
    """x: (B, T, D) float32. prep: output of prepare_params()."""
    b, t, d = x.shape

    def const_spec(shape):
        zeros = (0,) * len(shape)
        return pl.BlockSpec(shape, lambda i, _z=zeros: _z)

    in_specs = [
        pl.BlockSpec((1, t, d), lambda i: (i, 0, 0)),   # x
        const_spec(prep["w_attn"].shape),
        const_spec(prep["w_aproj3"].shape),
        const_spec(prep["w_fc"].shape),
        const_spec(prep["w_mproj"].shape),
        const_spec(prep["tab"].shape),
    ]
    out_spec = pl.BlockSpec((1, t, d), lambda i: (i, 0, 0))

    return pl.pallas_call(
        gpt_block_kernel,
        out_shape=jax.ShapeDtypeStruct((b, t, d), x.dtype),
        grid_spec=pltpu.PrefetchScalarGridSpec(
            num_scalar_prefetch=0,
            grid=(b,),                    # 2-way parallel -> both v7x TCs busy
            in_specs=in_specs,
            out_specs=out_spec,
        ),
        compiler_params=pltpu.CompilerParams(
            dimension_semantics=("parallel",)),
    )(x,
      prep["w_attn"], prep["w_aproj3"], prep["w_fc"], prep["w_mproj"],
      prep["tab"])


def init_params(key):
    ks = jax.random.split(key, 12)
    std = 0.02
    # Random (not all-zero/one) biases and LN params so the test exercises them.
    return {
        "w_attn":  std * jax.random.normal(ks[0], (D, 3 * D), jnp.float32),
        "b_attn":  0.1 * jax.random.normal(ks[1], (3 * D,), jnp.float32),
        "w_aproj": std * jax.random.normal(ks[2], (D, D), jnp.float32),
        "b_aproj": 0.1 * jax.random.normal(ks[3], (D,), jnp.float32),
        "ln1_w":   1.0 + 0.1 * jax.random.normal(ks[4], (D,), jnp.float32),
        "ln1_b":   0.1 * jax.random.normal(ks[5], (D,), jnp.float32),
        "w_fc":    std * jax.random.normal(ks[6], (D, DFF), jnp.float32),
        "b_fc":    0.1 * jax.random.normal(ks[7], (DFF,), jnp.float32),
        "w_mproj": std * jax.random.normal(ks[8], (DFF, D), jnp.float32),
        "b_mproj": 0.1 * jax.random.normal(ks[9], (D,), jnp.float32),
        "ln2_w":   1.0 + 0.1 * jax.random.normal(ks[10], (D,), jnp.float32),
        "ln2_b":   0.1 * jax.random.normal(ks[11], (D,), jnp.float32),
    }


def gpt_block_ref(x, p):
    """Pure-JAX f32 reference mirroring the PyTorch forward (dropout = identity)."""
    b, t, d = x.shape
    dh = d // H
    qkv = x @ p["w_attn"] + p["b_attn"]
    q, k, v = jnp.split(qkv, 3, axis=-1)

    def split_heads(z):
        return z.reshape(b, t, H, dh).transpose(0, 2, 1, 3)  # (B, H, T, dh)

    qh, kh, vh = split_heads(q), split_heads(k), split_heads(v)
    w = jnp.einsum("bhqd,bhkd->bhqk", qh, kh) / math.sqrt(dh)
    mask = jnp.tril(jnp.ones((t, t), jnp.float32))[None, None]
    w = w * mask + (-10000.0) * (1.0 - mask)
    w = jax.nn.softmax(w, axis=-1)
    a = jnp.einsum("bhqk,bhkd->bhqd", w, vh)
    a = a.transpose(0, 2, 1, 3).reshape(b, t, d)
    a = a @ p["w_aproj"] + p["b_aproj"]

    def ln(z, g, bb):
        mu = z.mean(-1, keepdims=True)
        var = ((z - mu) ** 2).mean(-1, keepdims=True)
        return (z - mu) / jnp.sqrt(var + EPS) * g + bb

    x1 = ln(x + a, p["ln1_w"], p["ln1_b"])
    h = _new_gelu(x1 @ p["w_fc"] + p["b_fc"])
    m = h @ p["w_mproj"] + p["b_mproj"]
    return ln(x1 + m, p["ln2_w"], p["ln2_b"])


if __name__ == "__main__":
    key = jax.random.PRNGKey(0)
    k_x, k_p = jax.random.split(key)
    x = jax.random.normal(k_x, (B, T, D), jnp.float32)
    params = init_params(k_p)
    prep = prepare_params(params)     # one-time transform (scale fold, bf16, packing)

    out = jax.block_until_ready(gpt_block(x, prep))

    ref = gpt_block_ref(x, params)
    assert out.shape == (B, T, D)
    # Tolerance accounts for bf16 MXU operands + approx-reciprocal softmax
    # (f32 reference); observed error is O(1e-3).
    max_err = float(jnp.max(jnp.abs(out - ref)))
    assert jnp.allclose(out, ref, atol=1e-2, rtol=1e-2), max_err
    print("KERNEL_OK")
</pallas_src>

<mosaic_0001>
module attributes {stable_mosaic.version = 11 : i64} {
  func.func @gpt_block_kernel(%arg0: i32, %arg1: memref<1x8x32xf32, #tpu.memory_space<vmem>>, %arg2: memref<32x96xbf16, #tpu.memory_space<vmem>>, %arg3: memref<4x8x32xbf16, #tpu.memory_space<vmem>>, %arg4: memref<32x128xbf16, #tpu.memory_space<vmem>>, %arg5: memref<128x32xbf16, #tpu.memory_space<vmem>>, %arg6: memref<8x128xf32, #tpu.memory_space<vmem>>, %arg7: memref<1x8x32xf32, #tpu.memory_space<vmem>>) attributes {dimension_semantics = [#tpu.dimension_semantics<parallel>], iteration_bounds = array<i64: 2>, scalar_prefetch = 0 : i64, scratch_operands = 0 : i64, tpu.core_type = #tpu.core_type<tc>, window_params = [{transform_indices = @transform_0, window_bounds = array<i64: 1, 8, 32>}, {pipeline_mode = #tpu.pipeline_mode<synchronous>, transform_indices = @transform_1, window_bounds = array<i64: 32, 96>}, {pipeline_mode = #tpu.pipeline_mode<synchronous>, transform_indices = @transform_2, window_bounds = array<i64: 4, 8, 32>}, {pipeline_mode = #tpu.pipeline_mode<synchronous>, transform_indices = @transform_3, window_bounds = array<i64: 32, 128>}, {pipeline_mode = #tpu.pipeline_mode<synchronous>, transform_indices = @transform_4, window_bounds = array<i64: 128, 32>}, {pipeline_mode = #tpu.pipeline_mode<synchronous>, transform_indices = @transform_5, window_bounds = array<i64: 8, 128>}, {transform_indices = @transform_6, window_bounds = array<i64: 1, 8, 32>}]} {
    %c0 = arith.constant 0 : index
    %c0_0 = arith.constant 0 : index
    %c0_1 = arith.constant 0 : index
    %0 = vector.load %arg1[%c0, %c0_0, %c0_1] : memref<1x8x32xf32, #tpu.memory_space<vmem>>, vector<1x8x32xf32>
    %1 = vector.shape_cast %0 : vector<1x8x32xf32> to vector<8x32xf32>
    %c0_2 = arith.constant 0 : index
    %c0_3 = arith.constant 0 : index
    %2 = vector.load %arg6[%c0_2, %c0_3] : memref<8x128xf32, #tpu.memory_space<vmem>>, vector<8x128xf32>
    %3 = vector.extract_strided_slice %2 {offsets = [0, 0], sizes = [1, 96], strides = [1, 1]} : vector<8x128xf32> to vector<1x96xf32>
    %4 = vector.extract_strided_slice %2 {offsets = [1, 0], sizes = [1, 32], strides = [1, 1]} : vector<8x128xf32> to vector<1x32xf32>
    %5 = vector.extract_strided_slice %2 {offsets = [2, 0], sizes = [1, 32], strides = [1, 1]} : vector<8x128xf32> to vector<1x32xf32>
    %6 = vector.extract_strided_slice %2 {offsets = [3, 0], sizes = [1, 32], strides = [1, 1]} : vector<8x128xf32> to vector<1x32xf32>
    %7 = vector.extract_strided_slice %2 {offsets = [4, 0], sizes = [1, 128], strides = [1, 1]} : vector<8x128xf32> to vector<1x128xf32>
    %8 = vector.extract_strided_slice %2 {offsets = [5, 0], sizes = [1, 32], strides = [1, 1]} : vector<8x128xf32> to vector<1x32xf32>
    %9 = vector.extract_strided_slice %2 {offsets = [6, 0], sizes = [1, 32], strides = [1, 1]} : vector<8x128xf32> to vector<1x32xf32>
    %10 = vector.extract_strided_slice %2 {offsets = [7, 0], sizes = [1, 32], strides = [1, 1]} : vector<8x128xf32> to vector<1x32xf32>
    %11 = arith.truncf %1 : vector<8x32xf32> to vector<8x32xbf16>
    %c0_4 = arith.constant 0 : index
    %c0_5 = arith.constant 0 : index
    %12 = vector.load %arg2[%c0_4, %c0_5] : memref<32x96xbf16, #tpu.memory_space<vmem>>, vector<32x96xbf16>
    %cst = arith.constant dense<0.000000e+00> : vector<8x96xf32>
    %13 = tpu.matmul %11, %12, %cst {dimension_numbers = #tpu.dot_dimension_numbers<[1], [0], [0], [1], [0, 0, 1, 1], [], []>} : vector<8x32xbf16>, vector<32x96xbf16>, vector<8x96xf32> -> vector<8x96xf32>
    %14 = vector.broadcast %3 : vector<1x96xf32> to vector<8x96xf32>
    %15 = arith.addf %13, %14 : vector<8x96xf32>
    %16 = vector.extract_strided_slice %15 {offsets = [0, 0], sizes = [8, 8], strides = [1, 1]} : vector<8x96xf32> to vector<8x8xf32>
    %17 = vector.extract_strided_slice %15 {offsets = [0, 8], sizes = [8, 8], strides = [1, 1]} : vector<8x96xf32> to vector<8x8xf32>
    %18 = vector.extract_strided_slice %15 {offsets = [0, 16], sizes = [8, 8], strides = [1, 1]} : vector<8x96xf32> to vector<8x8xf32>
    %19 = vector.extract_strided_slice %15 {offsets = [0, 24], sizes = [8, 8], strides = [1, 1]} : vector<8x96xf32> to vector<8x8xf32>
    %20 = vector.shape_cast %16 : vector<8x8xf32> to vector<1x8x8xf32>
    %21 = vector.shape_cast %17 : vector<8x8xf32> to vector<1x8x8xf32>
    %22 = vector.shape_cast %18 : vector<8x8xf32> to vector<1x8x8xf32>
    %23 = vector.shape_cast %19 : vector<8x8xf32> to vector<1x8x8xf32>
    %24 = tpu.concatenate %20, %21, %22, %23 in 0 : vector<1x8x8xf32>, vector<1x8x8xf32>, vector<1x8x8xf32>, vector<1x8x8xf32> -> vector<4x8x8xf32>
    %25 = vector.extract_strided_slice %15 {offsets = [0, 32], sizes = [8, 8], strides = [1, 1]} : vector<8x96xf32> to vector<8x8xf32>
    %26 = vector.extract_strided_slice %15 {offsets = [0, 40], sizes = [8, 8], strides = [1, 1]} : vector<8x96xf32> to vector<8x8xf32>
    %27 = vector.extract_strided_slice %15 {offsets = [0, 48], sizes = [8, 8], strides = [1, 1]} : vector<8x96xf32> to vector<8x8xf32>
    %28 = vector.extract_strided_slice %15 {offsets = [0, 56], sizes = [8, 8], strides = [1, 1]} : vector<8x96xf32> to vector<8x8xf32>
    %29 = vector.shape_cast %25 : vector<8x8xf32> to vector<1x8x8xf32>
    %30 = vector.shape_cast %26 : vector<8x8xf32> to vector<1x8x8xf32>
    %31 = vector.shape_cast %27 : vector<8x8xf32> to vector<1x8x8xf32>
    %32 = vector.shape_cast %28 : vector<8x8xf32> to vector<1x8x8xf32>
    %33 = tpu.concatenate %29, %30, %31, %32 in 0 : vector<1x8x8xf32>, vector<1x8x8xf32>, vector<1x8x8xf32>, vector<1x8x8xf32> -> vector<4x8x8xf32>
    %34 = vector.extract_strided_slice %15 {offsets = [0, 64], sizes = [8, 8], strides = [1, 1]} : vector<8x96xf32> to vector<8x8xf32>
    %35 = vector.extract_strided_slice %15 {offsets = [0, 72], sizes = [8, 8], strides = [1, 1]} : vector<8x96xf32> to vector<8x8xf32>
    %36 = vector.extract_strided_slice %15 {offsets = [0, 80], sizes = [8, 8], strides = [1, 1]} : vector<8x96xf32> to vector<8x8xf32>
    %37 = vector.extract_strided_slice %15 {offsets = [0, 88], sizes = [8, 8], strides = [1, 1]} : vector<8x96xf32> to vector<8x8xf32>
    %38 = vector.shape_cast %34 : vector<8x8xf32> to vector<1x8x8xf32>
    %39 = vector.shape_cast %35 : vector<8x8xf32> to vector<1x8x8xf32>
    %40 = vector.shape_cast %36 : vector<8x8xf32> to vector<1x8x8xf32>
    %41 = vector.shape_cast %37 : vector<8x8xf32> to vector<1x8x8xf32>
    %42 = tpu.concatenate %38, %39, %40, %41 in 0 : vector<1x8x8xf32>, vector<1x8x8xf32>, vector<1x8x8xf32>, vector<1x8x8xf32> -> vector<4x8x8xf32>
    "tpu.trace_start"() <{level = 10 : i32, message = "hqc,hkc->hqk"}> : () -> ()
    %cst_6 = arith.constant dense<0.000000e+00> : vector<4x8x8xf32>
    %43 = tpu.matmul %24, %33, %cst_6 {dimension_numbers = #tpu.dot_dimension_numbers<[2], [2], [1], [1], [0, 0, 0, 1, 1, 1], [0], [0]>} : vector<4x8x8xf32>, vector<4x8x8xf32>, vector<4x8x8xf32> -> vector<4x8x8xf32>
    "tpu.trace_stop"() : () -> ()
    %44 = tpu.iota {dimensions = array<i32: 1>} : vector<1x8x8xi32>
    %45 = tpu.iota {dimensions = array<i32: 2>} : vector<1x8x8xi32>
    %46 = arith.cmpi sle, %45, %44 : vector<1x8x8xi32>
    %cst_7 = arith.constant -1.000000e+04 : f32
    %47 = vector.shape_cast %46 : vector<1x8x8xi1> to vector<1x8x8xi1>
    %48 = vector.broadcast %47 : vector<1x8x8xi1> to vector<4x8x8xi1>
    %49 = vector.broadcast %cst_7 : f32 to vector<4x8x8xf32>
    %50 = arith.select %48, %43, %49 : vector<4x8x8xi1>, vector<4x8x8xf32>
    %cst_8 = arith.constant dense<0xFF800000> : vector<4x8xf32>
    %51 = vector.multi_reduction <maximumf>, %50, %cst_8 [2] : vector<4x8x8xf32> to vector<4x8xf32>
    %52 = vector.shape_cast %51 : vector<4x8xf32> to vector<4x8x1xf32>
    %53 = vector.broadcast %52 : vector<4x8x1xf32> to vector<4x8x8xf32>
    %54 = arith.subf %50, %53 : vector<4x8x8xf32>
    %55 = math.exp %54 : vector<4x8x8xf32>
    %cst_9 = arith.constant dense<0.000000e+00> : vector<4x8xf32>
    %56 = vector.multi_reduction <add>, %55, %cst_9 [2] : vector<4x8x8xf32> to vector<4x8xf32>
    %57 = vector.shape_cast %56 : vector<4x8xf32> to vector<4x8x1xf32>
    %58 = tpu.reciprocal %57 {approx = true} : vector<4x8x1xf32> -> vector<4x8x1xf32>
    %59 = vector.broadcast %58 : vector<4x8x1xf32> to vector<4x8x8xf32>
    %60 = arith.mulf %55, %59 : vector<4x8x8xf32>
    "tpu.trace_start"() <{level = 10 : i32, message = "hqk,hkc->hqc"}> : () -> ()
    %cst_10 = arith.constant dense<0.000000e+00> : vector<4x8x8xf32>
    %61 = tpu.matmul %60, %42, %cst_10 {dimension_numbers = #tpu.dot_dimension_numbers<[2], [1], [1], [2], [0, 0, 0, 1, 1, 2], [0], [0]>} : vector<4x8x8xf32>, vector<4x8x8xf32>, vector<4x8x8xf32> -> vector<4x8x8xf32>
    "tpu.trace_stop"() : () -> ()
    %62 = arith.truncf %61 : vector<4x8x8xf32> to vector<4x8x8xbf16>
    %c0_11 = arith.constant 0 : index
    %c0_12 = arith.constant 0 : index
    %c0_13 = arith.constant 0 : index
    %63 = vector.load %arg3[%c0_11, %c0_12, %c0_13] : memref<4x8x32xbf16, #tpu.memory_space<vmem>>, vector<4x8x32xbf16>
    "tpu.trace_start"() <{level = 10 : i32, message = "hqc,hcn->hqn"}> : () -> ()
    %cst_14 = arith.constant dense<0.000000e+00> : vector<4x8x32xf32>
    %64 = tpu.matmul %62, %63, %cst_14 {dimension_numbers = #tpu.dot_dimension_numbers<[2], [1], [1], [2], [0, 0, 0, 1, 1, 2], [0], [0]>} : vector<4x8x8xbf16>, vector<4x8x32xbf16>, vector<4x8x32xf32> -> vector<4x8x32xf32>
    "tpu.trace_stop"() : () -> ()
    %cst_15 = arith.constant dense<0.000000e+00> : vector<8x32xf32>
    %65 = vector.multi_reduction <add>, %64, %cst_15 [0] : vector<4x8x32xf32> to vector<8x32xf32>
    %66 = vector.broadcast %4 : vector<1x32xf32> to vector<8x32xf32>
    %67 = arith.addf %65, %66 : vector<8x32xf32>
    %68 = arith.addf %1, %67 : vector<8x32xf32>
    %cst_16 = arith.constant dense<0.000000e+00> : vector<8xf32>
    %69 = vector.multi_reduction <add>, %68, %cst_16 [1] : vector<8x32xf32> to vector<8xf32>
    %70 = vector.shape_cast %69 : vector<8xf32> to vector<8x1xf32>
    %cst_17 = arith.constant 3.200000e+01 : f32
    %71 = vector.broadcast %cst_17 : f32 to vector<8x1xf32>
    %72 = arith.divf %70, %71 : vector<8x1xf32>
    %73 = vector.broadcast %72 : vector<8x1xf32> to vector<8x32xf32>
    %74 = arith.subf %68, %73 : vector<8x32xf32>
    %75 = arith.mulf %74, %74 : vector<8x32xf32>
    %cst_18 = arith.constant dense<0.000000e+00> : vector<8xf32>
    %76 = vector.multi_reduction <add>, %75, %cst_18 [1] : vector<8x32xf32> to vector<8xf32>
    %77 = vector.shape_cast %76 : vector<8xf32> to vector<8x1xf32>
    %cst_19 = arith.constant 3.200000e+01 : f32
    %78 = vector.broadcast %cst_19 : f32 to vector<8x1xf32>
    %79 = arith.divf %77, %78 : vector<8x1xf32>
    %cst_20 = arith.constant 9.99999974E-6 : f32
    %80 = vector.broadcast %cst_20 : f32 to vector<8x1xf32>
    %81 = arith.addf %79, %80 : vector<8x1xf32>
    %82 = math.rsqrt %81 : vector<8x1xf32>
    %83 = vector.broadcast %82 : vector<8x1xf32> to vector<8x32xf32>
    %84 = arith.mulf %74, %83 : vector<8x32xf32>
    %85 = vector.broadcast %5 : vector<1x32xf32> to vector<8x32xf32>
    %86 = arith.mulf %84, %85 : vector<8x32xf32>
    %87 = vector.broadcast %6 : vector<1x32xf32> to vector<8x32xf32>
    %88 = arith.addf %86, %87 : vector<8x32xf32>
    %89 = arith.truncf %88 : vector<8x32xf32> to vector<8x32xbf16>
    %c0_21 = arith.constant 0 : index
    %c0_22 = arith.constant 0 : index
    %90 = vector.load %arg4[%c0_21, %c0_22] : memref<32x128xbf16, #tpu.memory_space<vmem>>, vector<32x128xbf16>
    %cst_23 = arith.constant dense<0.000000e+00> : vector<8x128xf32>
    %91 = tpu.matmul %89, %90, %cst_23 {dimension_numbers = #tpu.dot_dimension_numbers<[1], [0], [0], [1], [0, 0, 1, 1], [], []>} : vector<8x32xbf16>, vector<32x128xbf16>, vector<8x128xf32> -> vector<8x128xf32>
    %92 = vector.broadcast %7 : vector<1x128xf32> to vector<8x128xf32>
    %93 = arith.addf %91, %92 : vector<8x128xf32>
    %cst_24 = arith.constant 5.000000e-01 : f32
    %94 = vector.broadcast %cst_24 : f32 to vector<8x128xf32>
    %95 = arith.mulf %94, %93 : vector<8x128xf32>
    %cst_25 = arith.constant 4.471500e-02 : f32
    %96 = vector.broadcast %cst_25 : f32 to vector<8x128xf32>
    %97 = arith.mulf %96, %93 : vector<8x128xf32>
    %98 = arith.mulf %97, %93 : vector<8x128xf32>
    %99 = arith.mulf %98, %93 : vector<8x128xf32>
    %100 = arith.addf %93, %99 : vector<8x128xf32>
    %cst_26 = arith.constant 0.797884583 : f32
    %101 = vector.broadcast %cst_26 : f32 to vector<8x128xf32>
    %102 = arith.mulf %101, %100 : vector<8x128xf32>
    %103 = math.tanh %102 : vector<8x128xf32>
    %cst_27 = arith.constant 1.000000e+00 : f32
    %104 = vector.broadcast %cst_27 : f32 to vector<8x128xf32>
    %105 = arith.addf %104, %103 : vector<8x128xf32>
    %106 = arith.mulf %95, %105 : vector<8x128xf32>
    %107 = arith.truncf %106 : vector<8x128xf32> to vector<8x128xbf16>
    %c0_28 = arith.constant 0 : index
    %c0_29 = arith.constant 0 : index
    %108 = vector.load %arg5[%c0_28, %c0_29] : memref<128x32xbf16, #tpu.memory_space<vmem>>, vector<128x32xbf16>
    %cst_30 = arith.constant dense<0.000000e+00> : vector<8x32xf32>
    %109 = tpu.matmul %107, %108, %cst_30 {dimension_numbers = #tpu.dot_dimension_numbers<[1], [0], [0], [1], [0, 0, 1, 1], [], []>} : vector<8x128xbf16>, vector<128x32xbf16>, vector<8x32xf32> -> vector<8x32xf32>
    %110 = vector.broadcast %8 : vector<1x32xf32> to vector<8x32xf32>
    %111 = arith.addf %109, %110 : vector<8x32xf32>
    %112 = arith.addf %88, %111 : vector<8x32xf32>
    %cst_31 = arith.constant dense<0.000000e+00> : vector<8xf32>
    %113 = vector.multi_reduction <add>, %112, %cst_31 [1] : vector<8x32xf32> to vector<8xf32>
    %114 = vector.shape_cast %113 : vector<8xf32> to vector<8x1xf32>
    %cst_32 = arith.constant 3.200000e+01 : f32
    %115 = vector.broadcast %cst_32 : f32 to vector<8x1xf32>
    %116 = arith.divf %114, %115 : vector<8x1xf32>
    %117 = vector.broadcast %116 : vector<8x1xf32> to vector<8x32xf32>
    %118 = arith.subf %112, %117 : vector<8x32xf32>
    %119 = arith.mulf %118, %118 : vector<8x32xf32>
    %cst_33 = arith.constant dense<0.000000e+00> : vector<8xf32>
    %120 = vector.multi_reduction <add>, %119, %cst_33 [1] : vector<8x32xf32> to vector<8xf32>
    %121 = vector.shape_cast %120 : vector<8xf32> to vector<8x1xf32>
    %cst_34 = arith.constant 3.200000e+01 : f32
    %122 = vector.broadcast %cst_34 : f32 to vector<8x1xf32>
    %123 = arith.divf %121, %122 : vector<8x1xf32>
    %cst_35 = arith.constant 9.99999974E-6 : f32
    %124 = vector.broadcast %cst_35 : f32 to vector<8x1xf32>
    %125 = arith.addf %123, %124 : vector<8x1xf32>
    %126 = math.rsqrt %125 : vector<8x1xf32>
    %127 = vector.broadcast %126 : vector<8x1xf32> to vector<8x32xf32>
    %128 = arith.mulf %118, %127 : vector<8x32xf32>
    %129 = vector.broadcast %9 : vector<1x32xf32> to vector<8x32xf32>
    %130 = arith.mulf %128, %129 : vector<8x32xf32>
    %131 = vector.broadcast %10 : vector<1x32xf32> to vector<8x32xf32>
    %132 = arith.addf %130, %131 : vector<8x32xf32>
    %c0_36 = arith.constant 0 : index
    %c0_37 = arith.constant 0 : index
    %c0_38 = arith.constant 0 : index
    %133 = vector.load %arg7[%c0_36, %c0_37, %c0_38] : memref<1x8x32xf32, #tpu.memory_space<vmem>>, vector<1x8x32xf32>
    %134 = vector.shape_cast %133 : vector<1x8x32xf32> to vector<8x32xf32>
    %135 = vector.shape_cast %132 : vector<8x32xf32> to vector<1x8x32xf32>
    tpu.vector_store %arg7[%c0_36, %c0_37, %c0_38], %135 {strides = array<i32>} : memref<1x8x32xf32, #tpu.memory_space<vmem>>, vector<1x8x32xf32>,
    return
  }
  func.func @transform_0(%arg0: i32) -> (i32, i32, i32) {
    %c0_i32 = arith.constant 0 : i32
    %c0_i32_0 = arith.constant 0 : i32
    %c0_i32_1 = arith.constant 0 : i32
    return %arg0, %c0_i32, %c0_i32_0 : i32, i32, i32
  }
  func.func @transform_1(%arg0: i32) -> (i32, i32) {
    %c0_i32 = arith.constant 0 : i32
    %c0_i32_0 = arith.constant 0 : i32
    %c0_i32_1 = arith.constant 0 : i32
    return %c0_i32, %c0_i32_0 : i32, i32
  }
  func.func @transform_2(%arg0: i32) -> (i32, i32, i32) {
    %c0_i32 = arith.constant 0 : i32
    %c0_i32_0 = arith.constant 0 : i32
    %c0_i32_1 = arith.constant 0 : i32
    %c0_i32_2 = arith.constant 0 : i32
    return %c0_i32, %c0_i32_0, %c0_i32_1 : i32, i32, i32
  }
  func.func @transform_3(%arg0: i32) -> (i32, i32) {
    %c0_i32 = arith.constant 0 : i32
    %c0_i32_0 = arith.constant 0 : i32
    %c0_i32_1 = arith.constant 0 : i32
    return %c0_i32, %c0_i32_0 : i32, i32
  }
  func.func @transform_4(%arg0: i32) -> (i32, i32) {
    %c0_i32 = arith.constant 0 : i32
    %c0_i32_0 = arith.constant 0 : i32
    %c0_i32_1 = arith.constant 0 : i32
    return %c0_i32, %c0_i32_0 : i32, i32
  }
  func.func @transform_5(%arg0: i32) -> (i32, i32) {
    %c0_i32 = arith.constant 0 : i32
    %c0_i32_0 = arith.constant 0 : i32
    %c0_i32_1 = arith.constant 0 : i32
    return %c0_i32, %c0_i32_0 : i32, i32
  }
  func.func @transform_6(%arg0: i32) -> (i32, i32, i32) {
    %c0_i32 = arith.constant 0 : i32
    %c0_i32_0 = arith.constant 0 : i32
    %c0_i32_1 = arith.constant 0 : i32
    return %arg0, %c0_i32, %c0_i32_0 : i32, i32, i32
  }
}

</mosaic_0001>

<llo_original>
// kernel: tpu_custom_call.1
$region0: #{tpu_custom_call.1}
  #allocation0 [shape = 'u32[]', space=smem, size = 0x4, offset = 0x4, fixed_abs, tag = 'smem constant byte address 0x4 - core index']
  #allocation1 [shape = 'u32[144,128]{1,0:T(1,128)}', space=vmem, size = 0x12000, scoped, tag = 'internal scratch']
  %s0 = inlined_call_operand.vmem [shape: f32[2,8,32], index: 0, kind: input, shape index: {}]
  %s1 = inlined_call_operand.vmem [shape: bf16[32,96], index: 1, kind: input, shape index: {}]
  %s2 = inlined_call_operand.vmem [shape: bf16[4,8,32], index: 2, kind: input, shape index: {}]
  %s3 = inlined_call_operand.vmem [shape: bf16[32,128], index: 3, kind: input, shape index: {}]
  %s4 = inlined_call_operand.vmem [shape: bf16[128,32], index: 4, kind: input, shape index: {}]
  %s5 = inlined_call_operand.vmem [shape: f32[8,128], index: 5, kind: input, shape index: {}]
  %s6 = inlined_call_operand.hbm [shape: f32[2,8,32], index: 6, kind: output, shape index: {}]
  %s7 = sld [smem:[#allocation0]]
  $region57: #{tpu_custom_call.1} parent=0
    _
  %s9 = ssub.s32 1, %s7
  %s10 = scalar_select 0, %s9, %s7
  $region1: #{tpu_custom_call.1} parent=0
    #allocation2 [shape = 'u8[8192]{0}', space=vmem, size = 0x2000, scoped, tag = 'output window, operand 0']
    #allocation3 [shape = 's32[2]{0}', space=sflag, size = 0x8, scoped, tag = 'scoped memory for tpu_custom_call.1']
    %11 = vsyncpa [#allocation3], 0
    %s12 = scalar_lea.sflag [#allocation3], 1
    %13 = vsyncpa %s12, 0
    loop: start=0, step=1, limit=4
    $region2: #{tpu_custom_call.1} parent=1 // loop_pre_header
      _
    $region3: #{tpu_custom_call.1} parent=1 // loop_header
      %s15 = sphi 0, %s19
      %p16 = scmp.ge.s32.totalorder %s15, 4
      %s25 = sphi 0, %s27
      %s28 = sphi 0, %s25
      %s29 = sphi 0, %s28
      %s45 = sphi 0, %s29
      %s49 = sphi 0, %s49
      %s51 = sphi 0, %s49
      %s52 = sphi 0, %s51
      %s66 = sphi 0, %s52
      %s70 = sphi 0, %s70
      %s72 = sphi 0, %s70
      %s73 = sphi 0, %s72
      %s87 = sphi 0, %s73
      %s91 = sphi 0, %s91
      %s93 = sphi 0, %s91
      %s94 = sphi 0, %s93
      %s108 = sphi 0, %s94
      %s112 = sphi 0, %s112
      %s114 = sphi 0, %s112
      %s115 = sphi 0, %s114
      %s129 = sphi 0, %s115
      %s133 = sphi 0, %s133
      %s135 = sphi 0, %s133
      %s136 = sphi 0, %s135
      %s150 = sphi 0, %s136
      %s156 = sphi 0, %s158
      %s159 = sphi 0, %s156
      %s160 = sphi 0, %s159
      %s176 = sphi 0, %s160
    $region4: #{tpu_custom_call.1} parent=1 // loop_header_branch
      %18 = sbr.rel (%p16) target = $region8
    $region5: #{tpu_custom_call.1} parent=1 // loop_body
      %s20 = ssub.s32 %s15, 1
      %s21 = ssub.s32 %s15, 2
      %s22 = sadd.s32 %s15, 1
      %s23 = ssub.s32 %s15, %s22
      %p24 = scmp.eq.s32.totalorder %s23, 0
      %s26 = sadd.s32 %s25, 1
      %s27 = scalar_select %p24, %s25, %s26
      %p30 = pneg %p24
      %p31 = scmp.eq.s32.totalorder %s15, 1
      %p32 = por %p30, %p31
      %p33 = scmp.ne.s32.totalorder %s25, %s28
      %p34 = scmp.eq.s32.totalorder %s15, 0
      %p35 = por %p33, %p34
      %p36 = scmp.ne.s32.totalorder %s25, %s28
      %p37 = scmp.eq.s32.totalorder %s20, 1
      %p38 = por %p36, %p37
      %p39 = scmp.ne.s32.totalorder %s28, %s29
      %p40 = scmp.eq.s32.totalorder %s20, 0
      %p41 = por %p39, %p40
      %p42 = scmp.ne.s32.totalorder %s28, %s29
      %p43 = scmp.eq.s32.totalorder %s21, 1
      %p44 = por %p42, %p43
      %p46 = scmp.ne.s32.totalorder %s29, %s45
      %p47 = scmp.eq.s32.totalorder %s21, 0
      %p48 = por %p46, %p47
      %s50 = sadd.s32 %s49, 1
      %p53 = scmp.eq.s32.totalorder %s15, 1
      %p54 = scmp.ne.s32.totalorder %s49, %s51
      %p55 = scmp.eq.s32.totalorder %s15, 0
      %p56 = por %p54, %p55
      %p57 = scmp.ne.s32.totalorder %s49, %s51
      %p58 = scmp.eq.s32.totalorder %s20, 1
      %p59 = por %p57, %p58
      %p60 = scmp.ne.s32.totalorder %s51, %s52
      %p61 = scmp.eq.s32.totalorder %s20, 0
      %p62 = por %p60, %p61
      %p63 = scmp.ne.s32.totalorder %s51, %s52
      %p64 = scmp.eq.s32.totalorder %s21, 1
      %p65 = por %p63, %p64
      %p67 = scmp.ne.s32.totalorder %s52, %s66
      %p68 = scmp.eq.s32.totalorder %s21, 0
      %p69 = por %p67, %p68
      %s71 = sadd.s32 %s70, 1
      %p74 = scmp.eq.s32.totalorder %s15, 1
      %p75 = scmp.ne.s32.totalorder %s70, %s72
      %p76 = scmp.eq.s32.totalorder %s15, 0
      %p77 = por %p75, %p76
      %p78 = scmp.ne.s32.totalorder %s70, %s72
      %p79 = scmp.eq.s32.totalorder %s20, 1
      %p80 = por %p78, %p79
      %p81 = scmp.ne.s32.totalorder %s72, %s73
      %p82 = scmp.eq.s32.totalorder %s20, 0
      %p83 = por %p81, %p82
      %p84 = scmp.ne.s32.totalorder %s72, %s73
      %p85 = scmp.eq.s32.totalorder %s21, 1
      %p86 = por %p84, %p85
      %p88 = scmp.ne.s32.totalorder %s73, %s87
      %p89 = scmp.eq.s32.totalorder %s21, 0
      %p90 = por %p88, %p89
      %s92 = sadd.s32 %s91, 1
      %p95 = scmp.eq.s32.totalorder %s15, 1
      %p96 = scmp.ne.s32.totalorder %s91, %s93
      %p97 = scmp.eq.s32.totalorder %s15, 0
      %p98 = por %p96, %p97
      %p99 = scmp.ne.s32.totalorder %s91, %s93
      %p100 = scmp.eq.s32.totalorder %s20, 1
      %p101 = por %p99, %p100
      %p102 = scmp.ne.s32.totalorder %s93, %s94
      %p103 = scmp.eq.s32.totalorder %s20, 0
      %p104 = por %p102, %p103
      %p105 = scmp.ne.s32.totalorder %s93, %s94
      %p106 = scmp.eq.s32.totalorder %s21, 1
      %p107 = por %p105, %p106
      %p109 = scmp.ne.s32.totalorder %s94, %s108
      %p110 = scmp.eq.s32.totalorder %s21, 0
      %p111 = por %p109, %p110
      %s113 = sadd.s32 %s112, 1
      %p116 = scmp.eq.s32.totalorder %s15, 1
      %p117 = scmp.ne.s32.totalorder %s112, %s114
      %p118 = scmp.eq.s32.totalorder %s15, 0
      %p119 = por %p117, %p118
      %p120 = scmp.ne.s32.totalorder %s112, %s114
      %p121 = scmp.eq.s32.totalorder %s20, 1
      %p122 = por %p120, %p121
      %p123 = scmp.ne.s32.totalorder %s114, %s115
      %p124 = scmp.eq.s32.totalorder %s20, 0
      %p125 = por %p123, %p124
      %p126 = scmp.ne.s32.totalorder %s114, %s115
      %p127 = scmp.eq.s32.totalorder %s21, 1
      %p128 = por %p126, %p127
      %p130 = scmp.ne.s32.totalorder %s115, %s129
      %p131 = scmp.eq.s32.totalorder %s21, 0
      %p132 = por %p130, %p131
      %s134 = sadd.s32 %s133, 1
      %p137 = scmp.eq.s32.totalorder %s15, 1
      %p138 = scmp.ne.s32.totalorder %s133, %s135
      %p139 = scmp.eq.s32.totalorder %s15, 0
      %p140 = por %p138, %p139
      %p141 = scmp.ne.s32.totalorder %s133, %s135
      %p142 = scmp.eq.s32.totalorder %s20, 1
      %p143 = por %p141, %p142
      %p144 = scmp.ne.s32.totalorder %s135, %s136
      %p145 = scmp.eq.s32.totalorder %s20, 0
      %p146 = por %p144, %p145
      %p147 = scmp.ne.s32.totalorder %s135, %s136
      %p148 = scmp.eq.s32.totalorder %s21, 1
      %p149 = por %p147, %p148
      %p151 = scmp.ne.s32.totalorder %s136, %s150
      %p152 = scmp.eq.s32.totalorder %s21, 0
      %p153 = por %p151, %p152
      %s154 = ssub.s32 %s15, %s22
      %p155 = scmp.eq.s32.totalorder %s154, 0
      %s157 = sadd.s32 %s156, 1
      %s158 = scalar_select %p155, %s156, %s157
      %p161 = pneg %p155
      %p162 = scmp.eq.s32.totalorder %s15, 1
      %p163 = por %p161, %p162
      %p164 = scmp.ne.s32.totalorder %s156, %s159
      %p165 = scmp.eq.s32.totalorder %s15, 0
      %p166 = por %p164, %p165
      %p167 = scmp.ne.s32.totalorder %s156, %s159
      %p168 = scmp.eq.s32.totalorder %s20, 1
      %p169 = por %p167, %p168
      %p170 = scmp.ne.s32.totalorder %s159, %s160
      %p171 = scmp.eq.s32.totalorder %s20, 0
      %p172 = por %p170, %p171
      %p173 = scmp.ne.s32.totalorder %s159, %s160
      %p174 = scmp.eq.s32.totalorder %s21, 1
      %p175 = por %p173, %p174
      %p177 = scmp.ne.s32.totalorder %s160, %s176
      %p178 = scmp.eq.s32.totalorder %s21, 0
      %p179 = por %p177, %p178
      %p180 = scmp.le.s32.totalorder 1, %s15
      %p181 = scmp.lt.s32.totalorder %s15, 3
      %p182 = pnand %p180, %p181
      %p183 = pneg %p182
      // Predicated region
      $region9: #{tpu_custom_call.1} parent=5 // pred_check
        _
      $region10: #{tpu_custom_call.1} parent=5 // pred_check_branch
        %185 = sbr.rel (%p182) target = $region12
      $region11: #{tpu_custom_call.1} parent=5 // pred_region
        %s186 = ssub.s32 %s15, 1
        // Predicated region
        $region13: #{tpu_custom_call.1} parent=11 // pred_check
          %p187 = pneg %p62
        $region14: #{tpu_custom_call.1} parent=11 // pred_check_branch
          %189 = sbr.rel (%p187) target = $region16
        $region15: #{tpu_custom_call.1} parent=11 // pred_region
          _
        $region16: #{tpu_custom_call.1} parent=11 // pred_fallthru
          _
        // Predicated region
        $region17: #{tpu_custom_call.1} parent=11 // pred_check
          %p190 = pneg %p83
        $region18: #{tpu_custom_call.1} parent=11 // pred_check_branch
          %192 = sbr.rel (%p190) target = $region20
        $region19: #{tpu_custom_call.1} parent=11 // pred_region
          _
        $region20: #{tpu_custom_call.1} parent=11 // pred_fallthru
          _
        // Predicated region
        $region21: #{tpu_custom_call.1} parent=11 // pred_check
          %p193 = pneg %p104
        $region22: #{tpu_custom_call.1} parent=11 // pred_check_branch
          %195 = sbr.rel (%p193) target = $region24
        $region23: #{tpu_custom_call.1} parent=11 // pred_region
          _
        $region24: #{tpu_custom_call.1} parent=11 // pred_fallthru
          _
        // Predicated region
        $region25: #{tpu_custom_call.1} parent=11 // pred_check
          %p196 = pneg %p125
        $region26: #{tpu_custom_call.1} parent=11 // pred_check_branch
          %198 = sbr.rel (%p196) target = $region28
        $region27: #{tpu_custom_call.1} parent=11 // pred_region
          _
        $region28: #{tpu_custom_call.1} parent=11 // pred_fallthru
          _
        // Predicated region
        $region29: #{tpu_custom_call.1} parent=11 // pred_check
          %p199 = pneg %p146
        $region30: #{tpu_custom_call.1} parent=11 // pred_check_branch
          %201 = sbr.rel (%p199) target = $region32
        $region31: #{tpu_custom_call.1} parent=11 // pred_region
          _
        $region32: #{tpu_custom_call.1} parent=11 // pred_fallthru
          _
      $region12: #{tpu_custom_call.1} parent=5 // pred_fallthru
        _
      %p202 = scmp.lt.s32.totalorder %s15, 2
      // Predicated region
      $region33: #{tpu_custom_call.1} parent=5 // pred_check
        %p203 = pneg %p202
      $region34: #{tpu_custom_call.1} parent=5 // pred_check_branch
        %205 = sbr.rel (%p203) target = $region36
      $region35: #{tpu_custom_call.1} parent=5 // pred_region
        // Predicated region
        $region37: #{tpu_custom_call.1} parent=35 // pred_check
          %p206 = pneg %p35
        $region38: #{tpu_custom_call.1} parent=35 // pred_check_branch
          %208 = sbr.rel (%p206) target = $region40
        $region39: #{tpu_custom_call.1} parent=35 // pred_region
          %p209 = scmp.lt.s32.totalorder %s15, 1
          %s210 = scalar_select %p209, %s15, 1
          %s211 = smul.addr %s210, 8
          %s212 = scalar_lea.vmem %s0, %s211
        $region40: #{tpu_custom_call.1} parent=35 // pred_fallthru
          _
      $region36: #{tpu_custom_call.1} parent=5 // pred_fallthru
        _
      %p213 = scmp.le.s32.totalorder 1, %s15
      %p214 = scmp.lt.s32.totalorder %s15, 3
      %p215 = pnand %p213, %p214
      %p216 = pneg %p215
      // Predicated region
      $region41: #{tpu_custom_call.1} parent=5 // pred_check
        _
      $region42: #{tpu_custom_call.1} parent=5 // pred_check_branch
        %218 = sbr.rel (%p215) target = $region44
      $region43: #{tpu_custom_call.1} parent=5 // pred_region
        %s219 = ssub.s32 %s15, 1
        %p220 = scmp.lt.s32.totalorder %s20, 1
        %s221 = scalar_select %p220, %s20, 1
        %s222 = smul.addr %s221, 8
        %s223 = scalar_lea.vmem %s0, %s222
        %p224 = pneg %p41
        %p225 = pneg %p38
        %p226 = pneg %p62
        %p227 = pneg %p59
        %p228 = pneg %p83
        %p229 = pneg %p80
        %p230 = pneg %p104
        %p231 = pneg %p101
        %p232 = pneg %p125
        %p233 = pneg %p122
        %p234 = pneg %p146
        %p235 = pneg %p143
        %p236 = pneg %p172
        %p237 = pneg %p169
        %s238 = sand.u32 %s159, 1
        %s239 = scalar_lea.sflag [#allocation3], %s238
        %s240 = sand.u32 %s159, 1
        %s241 = smul.addr %s240, 8
        %s242 = scalar_lea.vmem [#allocation2], %s241
        %p243 = scmp.lt.s32.totalorder %s20, 1
        %s244 = scalar_select %p243, %s20, 1
        %s245 = smul.addr %s244, 8
        %s246 = scalar_lea.vmem %s0, %s245
        %v248 = vld [vmem:[%s246] sm:$0xff]
        %v249 = vld [vmem:[%s5] sm:$0xff]
        %v250 = vpack.c.bf16 %v248, %v248
        %v251 = vld [vmem:[%s1] sm:$0xf]
        %v252 = vld [vmem:[%s1 + $0x4] sm:$0xf]
        %v253 = vld [vmem:[%s1 + $0x8] sm:$0xf]
        %v254 = vld [vmem:[%s1 + $0xc] sm:$0xf]
        %v255 = vlaneseq
        %v256 = vshrl.u32 %v255, 7
        %v257 = vsub.s32 0, %v256
        %v258 = vrot.slane %v249, %v257
        %v263 = vunpack.c.l.b16 %v251
        %v264 = vunpack.c.l.b16 %v252
        %v265 = vunpack.c.l.b16 %v253
        %v266 = vunpack.c.l.b16 %v254
        %v267 = vpack.c.b16 %v264, %v263
        %v268 = vpack.c.b16 %v266, %v265
        %vm271 = vcmask 261120
        %v273 = vsel %vm271, %v250, 0
        %275 = vmatprep.subr.bf16.mxu0 0
        %276 = vmatpush1.bf16.msra.mxu0 %v267
        %277 = vmatprep.subr.bf16.mxu0 0
        %278 = vmatpush1.bf16.msra.mxu0 %v268
        %279 = vmatprep.subr.bf16.mxu0 0
        %280 = vmatpush1.bf16.msra.mxu0 0
        %281 = vmatprep.subr.bf16.mxu0 0
        %282 = vmatpush1.bf16.msra.mxu0 0
        %283 = vmatprep.subr.bf16.mxu0 0
        %284 = vmatpush1.bf16.msra.mxu0 0
        %285 = vmatprep.subr.bf16.mxu0 0
        %286 = vmatpush1.bf16.msra.mxu0 0
        %287 = vmatprep.subr.bf16.mxu0 0
        %288 = vmatpush1.bf16.msra.mxu0 0
        %289 = vmatprep.subr.bf16.mxu0 0
        %290 = vmatpush1.bf16.msra.mxu0 0
        %291 = vmatprep.subr.bf16.mxu0 0
        %292 = vmatpush1.bf16.msra.mxu0 0
        %293 = vmatprep.subr.bf16.mxu0 0
        %294 = vmatpush1.bf16.msra.mxu0 0
        %295 = vmatprep.subr.bf16.mxu0 0
        %296 = vmatpush1.bf16.msra.mxu0 0
        %297 = vmatprep.subr.bf16.mxu0 0
        %298 = vmatpush1.bf16.msra.mxu0 0
        %299 = vmatprep.subr.bf16.mxu0 0
        %300 = vmatpush1.bf16.msra.mxu0 0
        %301 = vmatprep.subr.bf16.mxu0 0
        %302 = vmatpush1.bf16.msra.mxu0 0
        %303 = vmatprep.subr.bf16.mxu0 0
        %304 = vmatpush1.bf16.msra.mxu0 0
        %305 = vmatprep.subr.bf16.mxu0 0
        %306 = vmatpush1.bf16.msra.mxu0 0
        %307 = vmatprep.mubr.bf16.mxu0 0
        %308 = vmatmul.mubr.bf16.gmra.mrb[0].mxu0 %v273
        %v309 = vpop.f32.mrb[0].mxu0
        %v310 = vadd.f32 %v258, %v309
        %v311 = vpop.f32.mrb[0].mxu0
        %v312 = vpop.f32.mrb[0].mxu0
        %v313 = vpop.f32.mrb[0].mxu0
        %314 = vdwg.mxu0
        %316 = vrot.lane.b32.xlu0 %v310, 120
        %v317 = vpop.permute.xlu0 %316
        %318 = vrot.lane.b32.xlu0 %v310, 112
        %v319 = vpop.permute.xlu0 %318
        %320 = vrot.lane.b32.xlu0 %v310, 104
        %v321 = vpop.permute.xlu0 %320
        %322 = vrot.lane.b32.xlu0 %v310, 96
        %v323 = vpop.permute.xlu0 %322
        %vm324 = vcmask 64512
        %v325 = vsel %vm324, %v310, 0
        %v327 = vsel %vm324, %v323, 0
        %329 = vmatprep.subr.mxu0 0.0
        %330 = vmatpush1.xpose.msra.mxu0 %v327
        %331 = vmatprep.subr.mxu0 0.0
        %332 = vmatpush1.xpose.msra.mxu0 0.0
        %333 = vmatprep.subr.mxu0 0.0
        %334 = vmatpush1.xpose.msra.mxu0 0.0
        %335 = vmatprep.subr.mxu0 0.0
        %336 = vmatpush1.xpose.msra.mxu0 0.0
        %337 = vmatprep.subr.mxu0 0.0
        %338 = vmatpush1.xpose.msra.mxu0 0.0
        %339 = vmatprep.subr.mxu0 0.0
        %340 = vmatpush1.xpose.msra.mxu0 0.0
        %341 = vmatprep.subr.mxu0 0.0
        %342 = vmatpush1.xpose.msra.mxu0 0.0
        %343 = vmatprep.subr.mxu0 0.0
        %344 = vmatpush1.xpose.msra.mxu0 0.0
        %345 = vmatprep.subr.mxu0 0.0
        %346 = vmatpush1.xpose.msra.mxu0 0.0
        %347 = vmatprep.subr.mxu0 0.0
        %348 = vmatpush1.xpose.msra.mxu0 0.0
        %349 = vmatprep.subr.mxu0 0.0
        %350 = vmatpush1.xpose.msra.mxu0 0.0
        %351 = vmatprep.subr.mxu0 0.0
        %352 = vmatpush1.xpose.msra.mxu0 0.0
        %353 = vmatprep.subr.mxu0 0.0
        %354 = vmatpush1.xpose.msra.mxu0 0.0
        %355 = vmatprep.subr.mxu0 0.0
        %356 = vmatpush1.xpose.msra.mxu0 0.0
        %357 = vmatprep.subr.mxu0 0.0
        %358 = vmatpush1.xpose.msra.mxu0 0.0
        %359 = vmatprep.subr.mxu0 0.0
        %360 = vmatpush1.xpose.msra.mxu0 0.0
        %361 = vmatprep.subr.mxu0 0.0
        %362 = vmatpush1.xpose.msra.mxu0 0.0
        %363 = vmatprep.subr.mxu0 0.0
        %364 = vmatpush1.xpose.msra.mxu0 0.0
        %365 = vmatprep.subr.mxu0 0.0
        %366 = vmatpush1.xpose.msra.mxu0 0.0
        %367 = vmatprep.subr.mxu0 0.0
        %368 = vmatpush1.xpose.msra.mxu0 0.0
        %369 = vmatprep.subr.mxu0 0.0
        %370 = vmatpush1.xpose.msra.mxu0 0.0
        %371 = vmatprep.subr.mxu0 0.0
        %372 = vmatpush1.xpose.msra.mxu0 0.0
        %373 = vmatprep.subr.mxu0 0.0
        %374 = vmatpush1.xpose.msra.mxu0 0.0
        %375 = vmatprep.subr.mxu0 0.0
        %376 = vmatpush1.xpose.msra.mxu0 0.0
        %377 = vmatprep.subr.mxu0 0.0
        %378 = vmatpush1.xpose.msra.mxu0 0.0
        %379 = vmatprep.subr.mxu0 0.0
        %380 = vmatpush1.xpose.msra.mxu0 0.0
        %381 = vmatprep.subr.mxu0 0.0
        %382 = vmatpush1.xpose.msra.mxu0 0.0
        %383 = vmatprep.subr.mxu0 0.0
        %384 = vmatpush1.xpose.msra.mxu0 0.0
        %385 = vmatprep.subr.mxu0 0.0
        %386 = vmatpush1.xpose.msra.mxu0 0.0
        %387 = vmatprep.subr.mxu0 0.0
        %388 = vmatpush1.xpose.msra.mxu0 0.0
        %389 = vmatprep.subr.mxu0 0.0
        %390 = vmatpush1.xpose.msra.mxu0 0.0
        %391 = vmatprep.subr.mxu0 0.0
        %392 = vmatpush1.xpose.msra.mxu0 0.0
        %393 = vmatprep.mubr.f32.mxu0 0.0
        %394 = vmatmul.mubr.f32.gmra.mrb[0].mxu0 %v325
        %v395 = vpop.f32.mrb[0].mxu0
        %v396 = vadd.f32 0.0, %v395
        %v397 = vpop.f32.mrb[0].mxu0
        %398 = vdwg.mxu0
        %399 = vrot.lane.b32.xlu0 %v317, 96
        %v400 = vpop.permute.xlu0 %399
        %v401 = vsel %vm324, %v317, 0
        %v403 = vsel %vm324, %v400, 0
        %405 = vmatprep.subr.mxu0 0.0
        %406 = vmatpush1.xpose.msra.mxu0 %v403
        %407 = vmatprep.subr.mxu0 0.0
        %408 = vmatpush1.xpose.msra.mxu0 0.0
        %409 = vmatprep.subr.mxu0 0.0
        %410 = vmatpush1.xpose.msra.mxu0 0.0
        %411 = vmatprep.subr.mxu0 0.0
        %412 = vmatpush1.xpose.msra.mxu0 0.0
        %413 = vmatprep.subr.mxu0 0.0
        %414 = vmatpush1.xpose.msra.mxu0 0.0
        %415 = vmatprep.subr.mxu0 0.0
        %416 = vmatpush1.xpose.msra.mxu0 0.0
        %417 = vmatprep.subr.mxu0 0.0
        %418 = vmatpush1.xpose.msra.mxu0 0.0
        %419 = vmatprep.subr.mxu0 0.0
        %420 = vmatpush1.xpose.msra.mxu0 0.0
        %421 = vmatprep.subr.mxu0 0.0
        %422 = vmatpush1.xpose.msra.mxu0 0.0
        %423 = vmatprep.subr.mxu0 0.0
        %424 = vmatpush1.xpose.msra.mxu0 0.0
        %425 = vmatprep.subr.mxu0 0.0
        %426 = vmatpush1.xpose.msra.mxu0 0.0
        %427 = vmatprep.subr.mxu0 0.0
        %428 = vmatpush1.xpose.msra.mxu0 0.0
        %429 = vmatprep.subr.mxu0 0.0
        %430 = vmatpush1.xpose.msra.mxu0 0.0
        %431 = vmatprep.subr.mxu0 0.0
        %432 = vmatpush1.xpose.msra.mxu0 0.0
        %433 = vmatprep.subr.mxu0 0.0
        %434 = vmatpush1.xpose.msra.mxu0 0.0
        %435 = vmatprep.subr.mxu0 0.0
        %436 = vmatpush1.xpose.msra.mxu0 0.0
        %437 = vmatprep.subr.mxu0 0.0
        %438 = vmatpush1.xpose.msra.mxu0 0.0
        %439 = vmatprep.subr.mxu0 0.0
        %440 = vmatpush1.xpose.msra.mxu0 0.0
        %441 = vmatprep.subr.mxu0 0.0
        %442 = vmatpush1.xpose.msra.mxu0 0.0
        %443 = vmatprep.subr.mxu0 0.0
        %444 = vmatpush1.xpose.msra.mxu0 0.0
        %445 = vmatprep.subr.mxu0 0.0
        %446 = vmatpush1.xpose.msra.mxu0 0.0
        %447 = vmatprep.subr.mxu0 0.0
        %448 = vmatpush1.xpose.msra.mxu0 0.0
        %449 = vmatprep.subr.mxu0 0.0
        %450 = vmatpush1.xpose.msra.mxu0 0.0
        %451 = vmatprep.subr.mxu0 0.0
        %452 = vmatpush1.xpose.msra.mxu0 0.0
        %453 = vmatprep.subr.mxu0 0.0
        %454 = vmatpush1.xpose.msra.mxu0 0.0
        %455 = vmatprep.subr.mxu0 0.0
        %456 = vmatpush1.xpose.msra.mxu0 0.0
        %457 = vmatprep.subr.mxu0 0.0
        %458 = vmatpush1.xpose.msra.mxu0 0.0
        %459 = vmatprep.subr.mxu0 0.0
        %460 = vmatpush1.xpose.msra.mxu0 0.0
        %461 = vmatprep.subr.mxu0 0.0
        %462 = vmatpush1.xpose.msra.mxu0 0.0
        %463 = vmatprep.subr.mxu0 0.0
        %464 = vmatpush1.xpose.msra.mxu0 0.0
        %465 = vmatprep.subr.mxu0 0.0
        %466 = vmatpush1.xpose.msra.mxu0 0.0
        %467 = vmatprep.subr.mxu0 0.0
        %468 = vmatpush1.xpose.msra.mxu0 0.0
        %469 = vmatprep.mubr.f32.mxu0 0.0
        %470 = vmatmul.mubr.f32.gmra.mrb[0].mxu0 %v401
        %v471 = vpop.f32.mrb[0].mxu0
        %v472 = vadd.f32 0.0, %v471
        %v473 = vpop.f32.mrb[0].mxu0
        %474 = vdwg.mxu0
        %475 = vrot.lane.b32.xlu0 %v319, 96
        %v476 = vpop.permute.xlu0 %475
        %v477 = vsel %vm324, %v319, 0
        %v479 = vsel %vm324, %v476, 0
        %481 = vmatprep.subr.mxu0 0.0
        %482 = vmatpush1.xpose.msra.mxu0 %v479
        %483 = vmatprep.subr.mxu0 0.0
        %484 = vmatpush1.xpose.msra.mxu0 0.0
        %485 = vmatprep.subr.mxu0 0.0
        %486 = vmatpush1.xpose.msra.mxu0 0.0
        %487 = vmatprep.subr.mxu0 0.0
        %488 = vmatpush1.xpose.msra.mxu0 0.0
        %489 = vmatprep.subr.mxu0 0.0
        %490 = vmatpush1.xpose.msra.mxu0 0.0
        %491 = vmatprep.subr.mxu0 0.0
        %492 = vmatpush1.xpose.msra.mxu0 0.0
        %493 = vmatprep.subr.mxu0 0.0
        %494 = vmatpush1.xpose.msra.mxu0 0.0
        %495 = vmatprep.subr.mxu0 0.0
        %496 = vmatpush1.xpose.msra.mxu0 0.0
        %497 = vmatprep.subr.mxu0 0.0
        %498 = vmatpush1.xpose.msra.mxu0 0.0
        %499 = vmatprep.subr.mxu0 0.0
        %500 = vmatpush1.xpose.msra.mxu0 0.0
        %501 = vmatprep.subr.mxu0 0.0
        %502 = vmatpush1.xpose.msra.mxu0 0.0
        %503 = vmatprep.subr.mxu0 0.0
        %504 = vmatpush1.xpose.msra.mxu0 0.0
        %505 = vmatprep.subr.mxu0 0.0
        %506 = vmatpush1.xpose.msra.mxu0 0.0
        %507 = vmatprep.subr.mxu0 0.0
        %508 = vmatpush1.xpose.msra.mxu0 0.0
        %509 = vmatprep.subr.mxu0 0.0
        %510 = vmatpush1.xpose.msra.mxu0 0.0
        %511 = vmatprep.subr.mxu0 0.0
        %512 = vmatpush1.xpose.msra.mxu0 0.0
        %513 = vmatprep.subr.mxu0 0.0
        %514 = vmatpush1.xpose.msra.mxu0 0.0
        %515 = vmatprep.subr.mxu0 0.0
        %516 = vmatpush1.xpose.msra.mxu0 0.0
        %517 = vmatprep.subr.mxu0 0.0
        %518 = vmatpush1.xpose.msra.mxu0 0.0
        %519 = vmatprep.subr.mxu0 0.0
        %520 = vmatpush1.xpose.msra.mxu0 0.0
        %521 = vmatprep.subr.mxu0 0.0
        %522 = vmatpush1.xpose.msra.mxu0 0.0
        %523 = vmatprep.subr.mxu0 0.0
        %524 = vmatpush1.xpose.msra.mxu0 0.0
        %525 = vmatprep.subr.mxu0 0.0
        %526 = vmatpush1.xpose.msra.mxu0 0.0
        %527 = vmatprep.subr.mxu0 0.0
        %528 = vmatpush1.xpose.msra.mxu0 0.0
        %529 = vmatprep.subr.mxu0 0.0
        %530 = vmatpush1.xpose.msra.mxu0 0.0
        %531 = vmatprep.subr.mxu0 0.0
        %532 = vmatpush1.xpose.msra.mxu0 0.0
        %533 = vmatprep.subr.mxu0 0.0
        %534 = vmatpush1.xpose.msra.mxu0 0.0
        %535 = vmatprep.subr.mxu0 0.0
        %536 = vmatpush1.xpose.msra.mxu0 0.0
        %537 = vmatprep.subr.mxu0 0.0
        %538 = vmatpush1.xpose.msra.mxu0 0.0
        %539 = vmatprep.subr.mxu0 0.0
        %540 = vmatpush1.xpose.msra.mxu0 0.0
        %541 = vmatprep.subr.mxu0 0.0
        %542 = vmatpush1.xpose.msra.mxu0 0.0
        %543 = vmatprep.subr.mxu0 0.0
        %544 = vmatpush1.xpose.msra.mxu0 0.0
        %545 = vmatprep.mubr.f32.mxu0 0.0
        %546 = vmatmul.mubr.f32.gmra.mrb[0].mxu0 %v477
        %v547 = vpop.f32.mrb[0].mxu0
        %v548 = vadd.f32 0.0, %v547
        %v549 = vpop.f32.mrb[0].mxu0
        %550 = vdwg.mxu0
        %551 = vrot.lane.b32.xlu0 %v321, 96
        %v552 = vpop.permute.xlu0 %551
        %v553 = vsel %vm324, %v321, 0
        %v555 = vsel %vm324, %v552, 0
        %557 = vmatprep.subr.mxu0 0.0
        %558 = vmatpush1.xpose.msra.mxu0 %v555
        %559 = vmatprep.subr.mxu0 0.0
        %560 = vmatpush1.xpose.msra.mxu0 0.0
        %561 = vmatprep.subr.mxu0 0.0
        %562 = vmatpush1.xpose.msra.mxu0 0.0
        %563 = vmatprep.subr.mxu0 0.0
        %564 = vmatpush1.xpose.msra.mxu0 0.0
        %565 = vmatprep.subr.mxu0 0.0
        %566 = vmatpush1.xpose.msra.mxu0 0.0
        %567 = vmatprep.subr.mxu0 0.0
        %568 = vmatpush1.xpose.msra.mxu0 0.0
        %569 = vmatprep.subr.mxu0 0.0
        %570 = vmatpush1.xpose.msra.mxu0 0.0
        %571 = vmatprep.subr.mxu0 0.0
        %572 = vmatpush1.xpose.msra.mxu0 0.0
        %573 = vmatprep.subr.mxu0 0.0
        %574 = vmatpush1.xpose.msra.mxu0 0.0
        %575 = vmatprep.subr.mxu0 0.0
        %576 = vmatpush1.xpose.msra.mxu0 0.0
        %577 = vmatprep.subr.mxu0 0.0
        %578 = vmatpush1.xpose.msra.mxu0 0.0
        %579 = vmatprep.subr.mxu0 0.0
        %580 = vmatpush1.xpose.msra.mxu0 0.0
        %581 = vmatprep.subr.mxu0 0.0
        %582 = vmatpush1.xpose.msra.mxu0 0.0
        %583 = vmatprep.subr.mxu0 0.0
        %584 = vmatpush1.xpose.msra.mxu0 0.0
        %585 = vmatprep.subr.mxu0 0.0
        %586 = vmatpush1.xpose.msra.mxu0 0.0
        %587 = vmatprep.subr.mxu0 0.0
        %588 = vmatpush1.xpose.msra.mxu0 0.0
        %589 = vmatprep.subr.mxu0 0.0
        %590 = vmatpush1.xpose.msra.mxu0 0.0
        %591 = vmatprep.subr.mxu0 0.0
        %592 = vmatpush1.xpose.msra.mxu0 0.0
        %593 = vmatprep.subr.mxu0 0.0
        %594 = vmatpush1.xpose.msra.mxu0 0.0
        %595 = vmatprep.subr.mxu0 0.0
        %596 = vmatpush1.xpose.msra.mxu0 0.0
        %597 = vmatprep.subr.mxu0 0.0
        %598 = vmatpush1.xpose.msra.mxu0 0.0
        %599 = vmatprep.subr.mxu0 0.0
        %600 = vmatpush1.xpose.msra.mxu0 0.0
        %601 = vmatprep.subr.mxu0 0.0
        %602 = vmatpush1.xpose.msra.mxu0 0.0
        %603 = vmatprep.subr.mxu0 0.0
        %604 = vmatpush1.xpose.msra.mxu0 0.0
        %605 = vmatprep.subr.mxu0 0.0
        %606 = vmatpush1.xpose.msra.mxu0 0.0
        %607 = vmatprep.subr.mxu0 0.0
        %608 = vmatpush1.xpose.msra.mxu0 0.0
        %609 = vmatprep.subr.mxu0 0.0
        %610 = vmatpush1.xpose.msra.mxu0 0.0
        %611 = vmatprep.subr.mxu0 0.0
        %612 = vmatpush1.xpose.msra.mxu0 0.0
        %613 = vmatprep.subr.mxu0 0.0
        %614 = vmatpush1.xpose.msra.mxu0 0.0
        %615 = vmatprep.subr.mxu0 0.0
        %616 = vmatpush1.xpose.msra.mxu0 0.0
        %617 = vmatprep.subr.mxu0 0.0
        %618 = vmatpush1.xpose.msra.mxu0 0.0
        %619 = vmatprep.subr.mxu0 0.0
        %620 = vmatpush1.xpose.msra.mxu0 0.0
        %621 = vmatprep.mubr.f32.mxu0 0.0
        %622 = vmatmul.mubr.f32.gmra.mrb[0].mxu0 %v553
        %v623 = vpop.f32.mrb[0].mxu0
        %v624 = vadd.f32 0.0, %v623
        %v625 = vpop.f32.mrb[0].mxu0
        %626 = vdwg.mxu0
        %v627 = vlaneseq
        %v628 = vshrl.u32 %v627, 7
        %v629 = vlaneseq
        %v630 = vand.u32 %v629, 127
        %vm631 = vcmp.le.s32.totalorder %v630, %v628
        %v632 = vsel %vm631, 1, 0
        %vm633 = vcmp.eq.s32.totalorder %v632, 1
        %v634 = vsel %vm633, %v396, -10000.0
        %v635 = vsel %vm633, %v472, -10000.0
        %v636 = vsel %vm633, %v548, -10000.0
        %v637 = vsel %vm633, %v624, -10000.0
        %v638 = vsel %vm324, %v634, -inf
        %639 = vmax.xlane.f32.xlu0 %v638
        %v640 = vpop.xlane.xlu0 %639
        %v641 = vsel %vm324, %v635, -inf
        %642 = vmax.xlane.f32.xlu0 %v641
        %v643 = vpop.xlane.xlu0 %642
        %v644 = vsel %vm324, %v636, -inf
        %645 = vmax.xlane.f32.xlu0 %v644
        %v646 = vpop.xlane.xlu0 %645
        %v647 = vsel %vm324, %v637, -inf
        %648 = vmax.xlane.f32.xlu0 %v647
        %v649 = vpop.xlane.xlu0 %648
        %v650 = vsub.f32 %v634, %v640
        %v651 = vsub.f32 %v635, %v643
        %v652 = vsub.f32 %v636, %v646
        %v653 = vsub.f32 %v637, %v649
        %v654 = vmul.f32 %v650, 1.442695
        %v655 = vpow.pop %v654
        %v656 = vmul.f32 %v651, 1.442695
        %v657 = vpow.pop %v656
        %v658 = vmul.f32 %v652, 1.442695
        %v659 = vpow.pop %v658
        %v660 = vmul.f32 %v653, 1.442695
        %v661 = vpow.pop %v660
        %v662 = vsel %vm324, %v655, 0.0
        %663 = vadd.xlane.f32.xlu0 %v662
        %v664 = vpop.xlane.xlu0 %663
        %v665 = vsel %vm324, %v657, 0.0
        %666 = vadd.xlane.f32.xlu0 %v665
        %v667 = vpop.xlane.xlu0 %666
        %v668 = vsel %vm324, %v659, 0.0
        %669 = vadd.xlane.f32.xlu0 %v668
        %v670 = vpop.xlane.xlu0 %669
        %v671 = vsel %vm324, %v661, 0.0
        %672 = vadd.xlane.f32.xlu0 %v671
        %v673 = vpop.xlane.xlu0 %672
        %v674 = vrcp.pop %v664
        %v675 = vrcp.pop %v667
        %v676 = vrcp.pop %v670
        %v677 = vrcp.pop %v673
        %v678 = vmul.f32 %v655, %v674
        %v679 = vmul.f32 %v657, %v675
        %v680 = vmul.f32 %v659, %v676
        %v681 = vmul.f32 %v661, %v677
        %682 = vrot.lane.b32.xlu0 %v310, 64
        %v683 = vpop.permute.xlu0 %682
        %v686 = vsel %vm324, %v678, 0
        %688 = vmatprep.subr.mxu0 0.0
        %689 = vmatpush1.msra.mxu0 %v683
        %690 = vmatprep.subr.mxu0 0.0
        %691 = vmatpush1.msra.mxu0 0.0
        %692 = vmatprep.subr.mxu0 0.0
        %693 = vmatpush1.msra.mxu0 0.0
        %694 = vmatprep.subr.mxu0 0.0
        %695 = vmatpush1.msra.mxu0 0.0
        %696 = vmatprep.subr.mxu0 0.0
        %697 = vmatpush1.msra.mxu0 0.0
        %698 = vmatprep.subr.mxu0 0.0
        %699 = vmatpush1.msra.mxu0 0.0
        %700 = vmatprep.subr.mxu0 0.0
        %701 = vmatpush1.msra.mxu0 0.0
        %702 = vmatprep.subr.mxu0 0.0
        %703 = vmatpush1.msra.mxu0 0.0
        %704 = vmatprep.subr.mxu0 0.0
        %705 = vmatpush1.msra.mxu0 0.0
        %706 = vmatprep.subr.mxu0 0.0
        %707 = vmatpush1.msra.mxu0 0.0
        %708 = vmatprep.subr.mxu0 0.0
        %709 = vmatpush1.msra.mxu0 0.0
        %710 = vmatprep.subr.mxu0 0.0
        %711 = vmatpush1.msra.mxu0 0.0
        %712 = vmatprep.subr.mxu0 0.0
        %713 = vmatpush1.msra.mxu0 0.0
        %714 = vmatprep.subr.mxu0 0.0
        %715 = vmatpush1.msra.mxu0 0.0
        %716 = vmatprep.subr.mxu0 0.0
        %717 = vmatpush1.msra.mxu0 0.0
        %718 = vmatprep.subr.mxu0 0.0
        %719 = vmatpush1.msra.mxu0 0.0
        %720 = vmatprep.subr.mxu0 0.0
        %721 = vmatpush1.msra.mxu0 0.0
        %722 = vmatprep.subr.mxu0 0.0
        %723 = vmatpush1.msra.mxu0 0.0
        %724 = vmatprep.subr.mxu0 0.0
        %725 = vmatpush1.msra.mxu0 0.0
        %726 = vmatprep.subr.mxu0 0.0
        %727 = vmatpush1.msra.mxu0 0.0
        %728 = vmatprep.subr.mxu0 0.0
        %729 = vmatpush1.msra.mxu0 0.0
        %730 = vmatprep.subr.mxu0 0.0
        %731 = vmatpush1.msra.mxu0 0.0
        %732 = vmatprep.subr.mxu0 0.0
        %733 = vmatpush1.msra.mxu0 0.0
        %734 = vmatprep.subr.mxu0 0.0
        %735 = vmatpush1.msra.mxu0 0.0
        %736 = vmatprep.subr.mxu0 0.0
        %737 = vmatpush1.msra.mxu0 0.0
        %738 = vmatprep.subr.mxu0 0.0
        %739 = vmatpush1.msra.mxu0 0.0
        %740 = vmatprep.subr.mxu0 0.0
        %741 = vmatpush1.msra.mxu0 0.0
        %742 = vmatprep.subr.mxu0 0.0
        %743 = vmatpush1.msra.mxu0 0.0
        %744 = vmatprep.subr.mxu0 0.0
        %745 = vmatpush1.msra.mxu0 0.0
        %746 = vmatprep.subr.mxu0 0.0
        %747 = vmatpush1.msra.mxu0 0.0
        %748 = vmatprep.subr.mxu0 0.0
        %749 = vmatpush1.msra.mxu0 0.0
        %750 = vmatprep.subr.mxu0 0.0
        %751 = vmatpush1.msra.mxu0 0.0
        %752 = vmatprep.mubr.f32.mxu0 0.0
        %753 = vmatmul.mubr.f32.gmra.mrb[0].mxu0 %v686
        %v754 = vpop.f32.mrb[0].mxu0
        %v755 = vadd.f32 0.0, %v754
        %v756 = vpop.f32.mrb[0].mxu0
        %757 = vdwg.mxu0
        %758 = vrot.lane.b32.xlu0 %v317, 64
        %v759 = vpop.permute.xlu0 %758
        %v762 = vsel %vm324, %v679, 0
        %764 = vmatprep.subr.mxu0 0.0
        %765 = vmatpush1.msra.mxu0 %v759
        %766 = vmatprep.subr.mxu0 0.0
        %767 = vmatpush1.msra.mxu0 0.0
        %768 = vmatprep.subr.mxu0 0.0
        %769 = vmatpush1.msra.mxu0 0.0
        %770 = vmatprep.subr.mxu0 0.0
        %771 = vmatpush1.msra.mxu0 0.0
        %772 = vmatprep.subr.mxu0 0.0
        %773 = vmatpush1.msra.mxu0 0.0
        %774 = vmatprep.subr.mxu0 0.0
        %775 = vmatpush1.msra.mxu0 0.0
        %776 = vmatprep.subr.mxu0 0.0
        %777 = vmatpush1.msra.mxu0 0.0
        %778 = vmatprep.subr.mxu0 0.0
        %779 = vmatpush1.msra.mxu0 0.0
        %780 = vmatprep.subr.mxu0 0.0
        %781 = vmatpush1.msra.mxu0 0.0
        %782 = vmatprep.subr.mxu0 0.0
        %783 = vmatpush1.msra.mxu0 0.0
        %784 = vmatprep.subr.mxu0 0.0
        %785 = vmatpush1.msra.mxu0 0.0
        %786 = vmatprep.subr.mxu0 0.0
        %787 = vmatpush1.msra.mxu0 0.0
        %788 = vmatprep.subr.mxu0 0.0
        %789 = vmatpush1.msra.mxu0 0.0
        %790 = vmatprep.subr.mxu0 0.0
        %791 = vmatpush1.msra.mxu0 0.0
        %792 = vmatprep.subr.mxu0 0.0
        %793 = vmatpush1.msra.mxu0 0.0
        %794 = vmatprep.subr.mxu0 0.0
        %795 = vmatpush1.msra.mxu0 0.0
        %796 = vmatprep.subr.mxu0 0.0
        %797 = vmatpush1.msra.mxu0 0.0
        %798 = vmatprep.subr.mxu0 0.0
        %799 = vmatpush1.msra.mxu0 0.0
        %800 = vmatprep.subr.mxu0 0.0
        %801 = vmatpush1.msra.mxu0 0.0
        %802 = vmatprep.subr.mxu0 0.0
        %803 = vmatpush1.msra.mxu0 0.0
        %804 = vmatprep.subr.mxu0 0.0
        %805 = vmatpush1.msra.mxu0 0.0
        %806 = vmatprep.subr.mxu0 0.0
        %807 = vmatpush1.msra.mxu0 0.0
        %808 = vmatprep.subr.mxu0 0.0
        %809 = vmatpush1.msra.mxu0 0.0
        %810 = vmatprep.subr.mxu0 0.0
        %811 = vmatpush1.msra.mxu0 0.0
        %812 = vmatprep.subr.mxu0 0.0
        %813 = vmatpush1.msra.mxu0 0.0
        %814 = vmatprep.subr.mxu0 0.0
        %815 = vmatpush1.msra.mxu0 0.0
        %816 = vmatprep.subr.mxu0 0.0
        %817 = vmatpush1.msra.mxu0 0.0
        %818 = vmatprep.subr.mxu0 0.0
        %819 = vmatpush1.msra.mxu0 0.0
        %820 = vmatprep.subr.mxu0 0.0
        %821 = vmatpush1.msra.mxu0 0.0
        %822 = vmatprep.subr.mxu0 0.0
        %823 = vmatpush1.msra.mxu0 0.0
        %824 = vmatprep.subr.mxu0 0.0
        %825 = vmatpush1.msra.mxu0 0.0
        %826 = vmatprep.subr.mxu0 0.0
        %827 = vmatpush1.msra.mxu0 0.0
        %828 = vmatprep.mubr.f32.mxu0 0.0
        %829 = vmatmul.mubr.f32.gmra.mrb[0].mxu0 %v762
        %v830 = vpop.f32.mrb[0].mxu0
        %v831 = vadd.f32 0.0, %v830
        %v832 = vpop.f32.mrb[0].mxu0
        %833 = vdwg.mxu0
        %834 = vrot.lane.b32.xlu0 %v319, 64
        %v835 = vpop.permute.xlu0 %834
        %v838 = vsel %vm324, %v680, 0
        %840 = vmatprep.subr.mxu0 0.0
        %841 = vmatpush1.msra.mxu0 %v835
        %842 = vmatprep.subr.mxu0 0.0
        %843 = vmatpush1.msra.mxu0 0.0
        %844 = vmatprep.subr.mxu0 0.0
        %845 = vmatpush1.msra.mxu0 0.0
        %846 = vmatprep.subr.mxu0 0.0
        %847 = vmatpush1.msra.mxu0 0.0
        %848 = vmatprep.subr.mxu0 0.0
        %849 = vmatpush1.msra.mxu0 0.0
        %850 = vmatprep.subr.mxu0 0.0
        %851 = vmatpush1.msra.mxu0 0.0
        %852 = vmatprep.subr.mxu0 0.0
        %853 = vmatpush1.msra.mxu0 0.0
        %854 = vmatprep.subr.mxu0 0.0
        %855 = vmatpush1.msra.mxu0 0.0
        %856 = vmatprep.subr.mxu0 0.0
        %857 = vmatpush1.msra.mxu0 0.0
        %858 = vmatprep.subr.mxu0 0.0
        %859 = vmatpush1.msra.mxu0 0.0
        %860 = vmatprep.subr.mxu0 0.0
        %861 = vmatpush1.msra.mxu0 0.0
        %862 = vmatprep.subr.mxu0 0.0
        %863 = vmatpush1.msra.mxu0 0.0
        %864 = vmatprep.subr.mxu0 0.0
        %865 = vmatpush1.msra.mxu0 0.0
        %866 = vmatprep.subr.mxu0 0.0
        %867 = vmatpush1.msra.mxu0 0.0
        %868 = vmatprep.subr.mxu0 0.0
        %869 = vmatpush1.msra.mxu0 0.0
        %870 = vmatprep.subr.mxu0 0.0
        %871 = vmatpush1.msra.mxu0 0.0
        %872 = vmatprep.subr.mxu0 0.0
        %873 = vmatpush1.msra.mxu0 0.0
        %874 = vmatprep.subr.mxu0 0.0
        %875 = vmatpush1.msra.mxu0 0.0
        %876 = vmatprep.subr.mxu0 0.0
        %877 = vmatpush1.msra.mxu0 0.0
        %878 = vmatprep.subr.mxu0 0.0
        %879 = vmatpush1.msra.mxu0 0.0
        %880 = vmatprep.subr.mxu0 0.0
        %881 = vmatpush1.msra.mxu0 0.0
        %882 = vmatprep.subr.mxu0 0.0
        %883 = vmatpush1.msra.mxu0 0.0
        %884 = vmatprep.subr.mxu0 0.0
        %885 = vmatpush1.msra.mxu0 0.0
        %886 = vmatprep.subr.mxu0 0.0
        %887 = vmatpush1.msra.mxu0 0.0
        %888 = vmatprep.subr.mxu0 0.0
        %889 = vmatpush1.msra.mxu0 0.0
        %890 = vmatprep.subr.mxu0 0.0
        %891 = vmatpush1.msra.mxu0 0.0
        %892 = vmatprep.subr.mxu0 0.0
        %893 = vmatpush1.msra.mxu0 0.0
        %894 = vmatprep.subr.mxu0 0.0
        %895 = vmatpush1.msra.mxu0 0.0
        %896 = vmatprep.subr.mxu0 0.0
        %897 = vmatpush1.msra.mxu0 0.0
        %898 = vmatprep.subr.mxu0 0.0
        %899 = vmatpush1.msra.mxu0 0.0
        %900 = vmatprep.subr.mxu0 0.0
        %901 = vmatpush1.msra.mxu0 0.0
        %902 = vmatprep.subr.mxu0 0.0
        %903 = vmatpush1.msra.mxu0 0.0
        %904 = vmatprep.mubr.f32.mxu0 0.0
        %905 = vmatmul.mubr.f32.gmra.mrb[0].mxu0 %v838
        %v906 = vpop.f32.mrb[0].mxu0
        %v907 = vadd.f32 0.0, %v906
        %v908 = vpop.f32.mrb[0].mxu0
        %909 = vdwg.mxu0
        %910 = vrot.lane.b32.xlu0 %v321, 64
        %v911 = vpop.permute.xlu0 %910
        %v914 = vsel %vm324, %v681, 0
        %916 = vmatprep.subr.mxu0 0.0
        %917 = vmatpush1.msra.mxu0 %v911
        %918 = vmatprep.subr.mxu0 0.0
        %919 = vmatpush1.msra.mxu0 0.0
        %920 = vmatprep.subr.mxu0 0.0
        %921 = vmatpush1.msra.mxu0 0.0
        %922 = vmatprep.subr.mxu0 0.0
        %923 = vmatpush1.msra.mxu0 0.0
        %924 = vmatprep.subr.mxu0 0.0
        %925 = vmatpush1.msra.mxu0 0.0
        %926 = vmatprep.subr.mxu0 0.0
        %927 = vmatpush1.msra.mxu0 0.0
        %928 = vmatprep.subr.mxu0 0.0
        %929 = vmatpush1.msra.mxu0 0.0
        %930 = vmatprep.subr.mxu0 0.0
        %931 = vmatpush1.msra.mxu0 0.0
        %932 = vmatprep.subr.mxu0 0.0
        %933 = vmatpush1.msra.mxu0 0.0
        %934 = vmatprep.subr.mxu0 0.0
        %935 = vmatpush1.msra.mxu0 0.0
        %936 = vmatprep.subr.mxu0 0.0
        %937 = vmatpush1.msra.mxu0 0.0
        %938 = vmatprep.subr.mxu0 0.0
        %939 = vmatpush1.msra.mxu0 0.0
        %940 = vmatprep.subr.mxu0 0.0
        %941 = vmatpush1.msra.mxu0 0.0
        %942 = vmatprep.subr.mxu0 0.0
        %943 = vmatpush1.msra.mxu0 0.0
        %944 = vmatprep.subr.mxu0 0.0
        %945 = vmatpush1.msra.mxu0 0.0
        %946 = vmatprep.subr.mxu0 0.0
        %947 = vmatpush1.msra.mxu0 0.0
        %948 = vmatprep.subr.mxu0 0.0
        %949 = vmatpush1.msra.mxu0 0.0
        %950 = vmatprep.subr.mxu0 0.0
        %951 = vmatpush1.msra.mxu0 0.0
        %952 = vmatprep.subr.mxu0 0.0
        %953 = vmatpush1.msra.mxu0 0.0
        %954 = vmatprep.subr.mxu0 0.0
        %955 = vmatpush1.msra.mxu0 0.0
        %956 = vmatprep.subr.mxu0 0.0
        %957 = vmatpush1.msra.mxu0 0.0
        %958 = vmatprep.subr.mxu0 0.0
        %959 = vmatpush1.msra.mxu0 0.0
        %960 = vmatprep.subr.mxu0 0.0
        %961 = vmatpush1.msra.mxu0 0.0
        %962 = vmatprep.subr.mxu0 0.0
        %963 = vmatpush1.msra.mxu0 0.0
        %964 = vmatprep.subr.mxu0 0.0
        %965 = vmatpush1.msra.mxu0 0.0
        %966 = vmatprep.subr.mxu0 0.0
        %967 = vmatpush1.msra.mxu0 0.0
        %968 = vmatprep.subr.mxu0 0.0
        %969 = vmatpush1.msra.mxu0 0.0
        %970 = vmatprep.subr.mxu0 0.0
        %971 = vmatpush1.msra.mxu0 0.0
        %972 = vmatprep.subr.mxu0 0.0
        %973 = vmatpush1.msra.mxu0 0.0
        %974 = vmatprep.subr.mxu0 0.0
        %975 = vmatpush1.msra.mxu0 0.0
        %976 = vmatprep.subr.mxu0 0.0
        %977 = vmatpush1.msra.mxu0 0.0
        %978 = vmatprep.subr.mxu0 0.0
        %979 = vmatpush1.msra.mxu0 0.0
        %980 = vmatprep.mubr.f32.mxu0 0.0
        %981 = vmatmul.mubr.f32.gmra.mrb[0].mxu0 %v914
        %v982 = vpop.f32.mrb[0].mxu0
        %v983 = vadd.f32 0.0, %v982
        %v984 = vpop.f32.mrb[0].mxu0
        %985 = vdwg.mxu0
        %v986 = vpack.c.bf16 %v755, %v755
        %v987 = vpack.c.bf16 %v831, %v831
        %v988 = vpack.c.bf16 %v907, %v907
        %v989 = vpack.c.bf16 %v983, %v983
        %v990 = vld [vmem:[%s2] sm:$0xf]
        %v991 = vld [vmem:[%s2 + $0x4] sm:$0xf]
        %v992 = vld [vmem:[%s2 + $0x8] sm:$0xf]
        %v993 = vld [vmem:[%s2 + $0xc] sm:$0xf]
        %v995 = vsel %vm324, %v986, 0
        %vm997 = vcmask 1043456
        %v999 = vsel %vm997, %v990, 0
        %1001 = vmatprep.subr.bf16.mxu0 0
        %1002 = vmatpush1.bf16.msra.mxu0 %v999
        %1003 = vmatprep.subr.bf16.mxu0 0
        %1004 = vmatpush1.bf16.msra.mxu0 0
        %1005 = vmatprep.subr.bf16.mxu0 0
        %1006 = vmatpush1.bf16.msra.mxu0 0
        %1007 = vmatprep.subr.bf16.mxu0 0
        %1008 = vmatpush1.bf16.msra.mxu0 0
        %1009 = vmatprep.subr.bf16.mxu0 0
        %1010 = vmatpush1.bf16.msra.mxu0 0
        %1011 = vmatprep.subr.bf16.mxu0 0
        %1012 = vmatpush1.bf16.msra.mxu0 0
        %1013 = vmatprep.subr.bf16.mxu0 0
        %1014 = vmatpush1.bf16.msra.mxu0 0
        %1015 = vmatprep.subr.bf16.mxu0 0
        %1016 = vmatpush1.bf16.msra.mxu0 0
        %1017 = vmatprep.subr.bf16.mxu0 0
        %1018 = vmatpush1.bf16.msra.mxu0 0
        %1019 = vmatprep.subr.bf16.mxu0 0
        %1020 = vmatpush1.bf16.msra.mxu0 0
        %1021 = vmatprep.subr.bf16.mxu0 0
        %1022 = vmatpush1.bf16.msra.mxu0 0
        %1023 = vmatprep.subr.bf16.mxu0 0
        %1024 = vmatpush1.bf16.msra.mxu0 0
        %1025 = vmatprep.subr.bf16.mxu0 0
        %1026 = vmatpush1.bf16.msra.mxu0 0
        %1027 = vmatprep.subr.bf16.mxu0 0
        %1028 = vmatpush1.bf16.msra.mxu0 0
        %1029 = vmatprep.subr.bf16.mxu0 0
        %1030 = vmatpush1.bf16.msra.mxu0 0
        %1031 = vmatprep.subr.bf16.mxu0 0
        %1032 = vmatpush1.bf16.msra.mxu0 0
        %1033 = vmatprep.mubr.bf16.mxu0 0
        %1034 = vmatmul.mubr.bf16.gmra.mrb[0].mxu0 %v995
        %v1035 = vpop.f32.mrb[0].mxu0
        %v1036 = vadd.f32 0.0, %v1035
        %v1037 = vpop.f32.mrb[0].mxu0
        %v1038 = vpop.f32.mrb[0].mxu0
        %v1039 = vpop.f32.mrb[0].mxu0
        %1040 = vdwg.mxu0
        %v1042 = vsel %vm324, %v987, 0
        %v1045 = vsel %vm997, %v991, 0
        %1047 = vmatprep.subr.bf16.mxu0 0
        %1048 = vmatpush1.bf16.msra.mxu0 %v1045
        %1049 = vmatprep.subr.bf16.mxu0 0
        %1050 = vmatpush1.bf16.msra.mxu0 0
        %1051 = vmatprep.subr.bf16.mxu0 0
        %1052 = vmatpush1.bf16.msra.mxu0 0
        %1053 = vmatprep.subr.bf16.mxu0 0
        %1054 = vmatpush1.bf16.msra.mxu0 0
        %1055 = vmatprep.subr.bf16.mxu0 0
        %1056 = vmatpush1.bf16.msra.mxu0 0
        %1057 = vmatprep.subr.bf16.mxu0 0
        %1058 = vmatpush1.bf16.msra.mxu0 0
        %1059 = vmatprep.subr.bf16.mxu0 0
        %1060 = vmatpush1.bf16.msra.mxu0 0
        %1061 = vmatprep.subr.bf16.mxu0 0
        %1062 = vmatpush1.bf16.msra.mxu0 0
        %1063 = vmatprep.subr.bf16.mxu0 0
        %1064 = vmatpush1.bf16.msra.mxu0 0
        %1065 = vmatprep.subr.bf16.mxu0 0
        %1066 = vmatpush1.bf16.msra.mxu0 0
        %1067 = vmatprep.subr.bf16.mxu0 0
        %1068 = vmatpush1.bf16.msra.mxu0 0
        %1069 = vmatprep.subr.bf16.mxu0 0
        %1070 = vmatpush1.bf16.msra.mxu0 0
        %1071 = vmatprep.subr.bf16.mxu0 0
        %1072 = vmatpush1.bf16.msra.mxu0 0
        %1073 = vmatprep.subr.bf16.mxu0 0
        %1074 = vmatpush1.bf16.msra.mxu0 0
        %1075 = vmatprep.subr.bf16.mxu0 0
        %1076 = vmatpush1.bf16.msra.mxu0 0
        %1077 = vmatprep.subr.bf16.mxu0 0
        %1078 = vmatpush1.bf16.msra.mxu0 0
        %1079 = vmatprep.mubr.bf16.mxu0 0
        %1080 = vmatmul.mubr.bf16.gmra.mrb[0].mxu0 %v1042
        %v1081 = vpop.f32.mrb[0].mxu0
        %v1082 = vadd.f32 0.0, %v1081
        %v1083 = vpop.f32.mrb[0].mxu0
        %v1084 = vpop.f32.mrb[0].mxu0
        %v1085 = vpop.f32.mrb[0].mxu0
        %1086 = vdwg.mxu0
        %v1088 = vsel %vm324, %v988, 0
        %v1091 = vsel %vm997, %v992, 0
        %1093 = vmatprep.subr.bf16.mxu0 0
        %1094 = vmatpush1.bf16.msra.mxu0 %v1091
        %1095 = vmatprep.subr.bf16.mxu0 0
        %1096 = vmatpush1.bf16.msra.mxu0 0
        %1097 = vmatprep.subr.bf16.mxu0 0
        %1098 = vmatpush1.bf16.msra.mxu0 0
        %1099 = vmatprep.subr.bf16.mxu0 0
        %1100 = vmatpush1.bf16.msra.mxu0 0
        %1101 = vmatprep.subr.bf16.mxu0 0
        %1102 = vmatpush1.bf16.msra.mxu0 0
        %1103 = vmatprep.subr.bf16.mxu0 0
        %1104 = vmatpush1.bf16.msra.mxu0 0
        %1105 = vmatprep.subr.bf16.mxu0 0
        %1106 = vmatpush1.bf16.msra.mxu0 0
        %1107 = vmatprep.subr.bf16.mxu0 0
        %1108 = vmatpush1.bf16.msra.mxu0 0
        %1109 = vmatprep.subr.bf16.mxu0 0
        %1110 = vmatpush1.bf16.msra.mxu0 0
        %1111 = vmatprep.subr.bf16.mxu0 0
        %1112 = vmatpush1.bf16.msra.mxu0 0
        %1113 = vmatprep.subr.bf16.mxu0 0
        %1114 = vmatpush1.bf16.msra.mxu0 0
        %1115 = vmatprep.subr.bf16.mxu0 0
        %1116 = vmatpush1.bf16.msra.mxu0 0
        %1117 = vmatprep.subr.bf16.mxu0 0
        %1118 = vmatpush1.bf16.msra.mxu0 0
        %1119 = vmatprep.subr.bf16.mxu0 0
        %1120 = vmatpush1.bf16.msra.mxu0 0
        %1121 = vmatprep.subr.bf16.mxu0 0
        %1122 = vmatpush1.bf16.msra.mxu0 0
        %1123 = vmatprep.subr.bf16.mxu0 0
        %1124 = vmatpush1.bf16.msra.mxu0 0
        %1125 = vmatprep.mubr.bf16.mxu0 0
        %1126 = vmatmul.mubr.bf16.gmra.mrb[0].mxu0 %v1088
        %v1127 = vpop.f32.mrb[0].mxu0
        %v1128 = vadd.f32 0.0, %v1127
        %v1129 = vpop.f32.mrb[0].mxu0
        %v1130 = vpop.f32.mrb[0].mxu0
        %v1131 = vpop.f32.mrb[0].mxu0
        %1132 = vdwg.mxu0
        %v1134 = vsel %vm324, %v989, 0
        %v1137 = vsel %vm997, %v993, 0
        %1139 = vmatprep.subr.bf16.mxu0 0
        %1140 = vmatpush1.bf16.msra.mxu0 %v1137
        %1141 = vmatprep.subr.bf16.mxu0 0
        %1142 = vmatpush1.bf16.msra.mxu0 0
        %1143 = vmatprep.subr.bf16.mxu0 0
        %1144 = vmatpush1.bf16.msra.mxu0 0
        %1145 = vmatprep.subr.bf16.mxu0 0
        %1146 = vmatpush1.bf16.msra.mxu0 0
        %1147 = vmatprep.subr.bf16.mxu0 0
        %1148 = vmatpush1.bf16.msra.mxu0 0
        %1149 = vmatprep.subr.bf16.mxu0 0
        %1150 = vmatpush1.bf16.msra.mxu0 0
        %1151 = vmatprep.subr.bf16.mxu0 0
        %1152 = vmatpush1.bf16.msra.mxu0 0
        %1153 = vmatprep.subr.bf16.mxu0 0
        %1154 = vmatpush1.bf16.msra.mxu0 0
        %1155 = vmatprep.subr.bf16.mxu0 0
        %1156 = vmatpush1.bf16.msra.mxu0 0
        %1157 = vmatprep.subr.bf16.mxu0 0
        %1158 = vmatpush1.bf16.msra.mxu0 0
        %1159 = vmatprep.subr.bf16.mxu0 0
        %1160 = vmatpush1.bf16.msra.mxu0 0
        %1161 = vmatprep.subr.bf16.mxu0 0
        %1162 = vmatpush1.bf16.msra.mxu0 0
        %1163 = vmatprep.subr.bf16.mxu0 0
        %1164 = vmatpush1.bf16.msra.mxu0 0
        %1165 = vmatprep.subr.bf16.mxu0 0
        %1166 = vmatpush1.bf16.msra.mxu0 0
        %1167 = vmatprep.subr.bf16.mxu0 0
        %1168 = vmatpush1.bf16.msra.mxu0 0
        %1169 = vmatprep.subr.bf16.mxu0 0
        %1170 = vmatpush1.bf16.msra.mxu0 0
        %1171 = vmatprep.mubr.bf16.mxu0 0
        %1172 = vmatmul.mubr.bf16.gmra.mrb[0].mxu0 %v1134
        %v1173 = vpop.f32.mrb[0].mxu0
        %v1174 = vadd.f32 0.0, %v1173
        %v1175 = vpop.f32.mrb[0].mxu0
        %v1176 = vpop.f32.mrb[0].mxu0
        %v1177 = vpop.f32.mrb[0].mxu0
        %1178 = vdwg.mxu0
        %v1179 = vsel %vm271, %v1036, 0.0
        %v1180 = vsel %vm271, %v1082, 0.0
        %v1181 = vadd.f32 %v1179, %v1180
        %v1182 = vsel %vm271, %v1128, 0.0
        %v1183 = vadd.f32 %v1181, %v1182
        %v1184 = vsel %vm271, %v1174, 0.0
        %v1185 = vadd.f32 %v1183, %v1184
        %v1186 = vlaneseq
        %v1187 = vshrl.u32 %v1186, 7
        %v1188 = vsub.s32 1, %v1187
        %v1189 = vrot.slane %v249, %v1188
        %v1190 = vadd.f32 %v1185, %v1189
        %v1191 = vadd.f32 %v248, %v1190
        %v1192 = vsel %vm271, %v1191, 0.0
        %1193 = vadd.xlane.f32.xlu0 %v1192
        %v1194 = vpop.xlane.xlu0 %1193
        %v1195 = vrcp.pop 32.0
        %v1196 = vmul.f32 %v1194, %v1195
        %v1197 = vsub.f32 %v1191, %v1196
        %v1198 = vmul.f32 %v1197, %v1197
        %v1199 = vsel %vm271, %v1198, 0.0
        %1200 = vadd.xlane.f32.xlu0 %v1199
        %v1201 = vpop.xlane.xlu0 %1200
        %v1202 = vmul.f32 %v1201, %v1195
        %v1203 = vadd.f32 %v1202, 1e-05
        %v1204 = vrsqrt.pop %v1203
        %v1205 = vmul.f32 %v1197, %v1204
        %v1206 = vlaneseq
        %v1207 = vshrl.u32 %v1206, 7
        %v1208 = vsub.s32 2, %v1207
        %v1209 = vrot.slane %v249, %v1208
        %v1210 = vmul.f32 %v1205, %v1209
        %v1211 = vlaneseq
        %v1212 = vshrl.u32 %v1211, 7
        %v1213 = vsub.s32 3, %v1212
        %v1214 = vrot.slane %v249, %v1213
        %v1215 = vadd.f32 %v1210, %v1214
        %v1216 = vpack.c.bf16 %v1215, %v1215
        %v1217 = vld [vmem:[%s3] sm:$0xf]
        %v1218 = vld [vmem:[%s3 + $0x4] sm:$0xf]
        %v1219 = vld [vmem:[%s3 + $0x8] sm:$0xf]
        %v1220 = vld [vmem:[%s3 + $0xc] sm:$0xf]
        %v1221 = vlaneseq
        %v1222 = vshrl.u32 %v1221, 7
        %v1223 = vsub.s32 4, %v1222
        %v1224 = vrot.slane %v249, %v1223
        %v1229 = vunpack.c.l.b16 %v1217
        %v1230 = vunpack.c.l.b16 %v1218
        %v1231 = vunpack.c.l.b16 %v1219
        %v1232 = vunpack.c.l.b16 %v1220
        %v1233 = vpack.c.b16 %v1230, %v1229
        %v1234 = vpack.c.b16 %v1232, %v1231
        %v1238 = vsel %vm271, %v1216, 0
        %1240 = vmatprep.subr.bf16.mxu0 0
        %1241 = vmatpush1.bf16.msra.mxu0 %v1233
        %1242 = vmatprep.subr.bf16.mxu0 0
        %1243 = vmatpush1.bf16.msra.mxu0 %v1234
        %1244 = vmatprep.subr.bf16.mxu0 0
        %1245 = vmatpush1.bf16.msra.mxu0 0
        %1246 = vmatprep.subr.bf16.mxu0 0
        %1247 = vmatpush1.bf16.msra.mxu0 0
        %1248 = vmatprep.subr.bf16.mxu0 0
        %1249 = vmatpush1.bf16.msra.mxu0 0
        %1250 = vmatprep.subr.bf16.mxu0 0
        %1251 = vmatpush1.bf16.msra.mxu0 0
        %1252 = vmatprep.subr.bf16.mxu0 0
        %1253 = vmatpush1.bf16.msra.mxu0 0
        %1254 = vmatprep.subr.bf16.mxu0 0
        %1255 = vmatpush1.bf16.msra.mxu0 0
        %1256 = vmatprep.subr.bf16.mxu0 0
        %1257 = vmatpush1.bf16.msra.mxu0 0
        %1258 = vmatprep.subr.bf16.mxu0 0
        %1259 = vmatpush1.bf16.msra.mxu0 0
        %1260 = vmatprep.subr.bf16.mxu0 0
        %1261 = vmatpush1.bf16.msra.mxu0 0
        %1262 = vmatprep.subr.bf16.mxu0 0
        %1263 = vmatpush1.bf16.msra.mxu0 0
        %1264 = vmatprep.subr.bf16.mxu0 0
        %1265 = vmatpush1.bf16.msra.mxu0 0
        %1266 = vmatprep.subr.bf16.mxu0 0
        %1267 = vmatpush1.bf16.msra.mxu0 0
        %1268 = vmatprep.subr.bf16.mxu0 0
        %1269 = vmatpush1.bf16.msra.mxu0 0
        %1270 = vmatprep.subr.bf16.mxu0 0
        %1271 = vmatpush1.bf16.msra.mxu0 0
        %1272 = vmatprep.mubr.bf16.mxu0 0
        %1273 = vmatmul.mubr.bf16.gmra.mrb[0].mxu0 %v1238
        %v1274 = vpop.f32.mrb[0].mxu0
        %v1275 = vadd.f32 %v1224, %v1274
        %v1276 = vpop.f32.mrb[0].mxu0
        %v1277 = vpop.f32.mrb[0].mxu0
        %v1278 = vpop.f32.mrb[0].mxu0
        %1279 = vdwg.mxu0
        %v1280 = vmul.f32 %v1275, 0.5
        %v1281 = vmul.f32 %v1275, 0.044715
        %v1282 = vmul.f32 %v1281, %v1275
        %v1283 = vmul.f32 %v1282, %v1275
        %v1284 = vadd.f32 %v1275, %v1283
        %v1285 = vmul.f32 %v1284, 0.7978846
        %v1286 = vtanh.pop %v1285
        %v1287 = vadd.f32 %v1286, 1.0
        %v1288 = vmul.f32 %v1280, %v1287
        %v1289 = vpack.c.bf16 %v1288, %v1288
        %v1290 = vld [vmem:[%s4] sm:$0xf]
        %v1291 = vld [vmem:[%s4 + $0x4] sm:$0xf]
        %v1292 = vld [vmem:[%s4 + $0x8] sm:$0xf]
        %v1293 = vld [vmem:[%s4 + $0xc] sm:$0xf]
        %v1294 = vld [vmem:[%s4 + $0x10] sm:$0xf]
        %v1295 = vld [vmem:[%s4 + $0x14] sm:$0xf]
        %v1296 = vld [vmem:[%s4 + $0x18] sm:$0xf]
        %v1297 = vld [vmem:[%s4 + $0x1c] sm:$0xf]
        %v1298 = vld [vmem:[%s4 + $0x20] sm:$0xf]
        %v1299 = vld [vmem:[%s4 + $0x24] sm:$0xf]
        %v1300 = vld [vmem:[%s4 + $0x28] sm:$0xf]
        %v1301 = vld [vmem:[%s4 + $0x2c] sm:$0xf]
        %v1302 = vld [vmem:[%s4 + $0x30] sm:$0xf]
        %v1303 = vld [vmem:[%s4 + $0x34] sm:$0xf]
        %v1304 = vld [vmem:[%s4 + $0x38] sm:$0xf]
        %v1305 = vld [vmem:[%s4 + $0x3c] sm:$0xf]
        %v1306 = vlaneseq
        %v1307 = vshrl.u32 %v1306, 7
        %v1308 = vsub.s32 5, %v1307
        %v1309 = vrot.slane %v249, %v1308
        %v1326 = vunpack.c.l.b16 %v1290
        %v1327 = vunpack.c.l.b16 %v1291
        %v1328 = vunpack.c.l.b16 %v1292
        %v1329 = vunpack.c.l.b16 %v1293
        %v1330 = vunpack.c.l.b16 %v1294
        %v1331 = vunpack.c.l.b16 %v1295
        %v1332 = vunpack.c.l.b16 %v1296
        %v1333 = vunpack.c.l.b16 %v1297
        %v1334 = vunpack.c.l.b16 %v1298
        %v1335 = vunpack.c.l.b16 %v1299
        %v1336 = vunpack.c.l.b16 %v1300
        %v1337 = vunpack.c.l.b16 %v1301
        %v1338 = vunpack.c.l.b16 %v1302
        %v1339 = vunpack.c.l.b16 %v1303
        %v1340 = vunpack.c.l.b16 %v1304
        %v1341 = vunpack.c.l.b16 %v1305
        %v1342 = vpack.c.b16 %v1327, %v1326
        %v1343 = vpack.c.b16 %v1329, %v1328
        %v1344 = vpack.c.b16 %v1331, %v1330
        %v1345 = vpack.c.b16 %v1333, %v1332
        %v1346 = vpack.c.b16 %v1335, %v1334
        %v1347 = vpack.c.b16 %v1337, %v1336
        %v1348 = vpack.c.b16 %v1339, %v1338
        %v1349 = vpack.c.b16 %v1341, %v1340
        %1358 = vmatprep.subr.bf16.mxu0 0
        %1359 = vmatpush1.bf16.msra.mxu0 %v1342
        %1360 = vmatprep.subr.bf16.mxu0 0
        %1361 = vmatpush1.bf16.msra.mxu0 %v1343
        %1362 = vmatprep.subr.bf16.mxu0 0
        %1363 = vmatpush1.bf16.msra.mxu0 %v1344
        %1364 = vmatprep.subr.bf16.mxu0 0
        %1365 = vmatpush1.bf16.msra.mxu0 %v1345
        %1366 = vmatprep.subr.bf16.mxu0 0
        %1367 = vmatpush1.bf16.msra.mxu0 %v1346
        %1368 = vmatprep.subr.bf16.mxu0 0
        %1369 = vmatpush1.bf16.msra.mxu0 %v1347
        %1370 = vmatprep.subr.bf16.mxu0 0
        %1371 = vmatpush1.bf16.msra.mxu0 %v1348
        %1372 = vmatprep.subr.bf16.mxu0 0
        %1373 = vmatpush1.bf16.msra.mxu0 %v1349
        %1374 = vmatprep.subr.bf16.mxu0 0
        %1375 = vmatpush1.bf16.msra.mxu0 0
        %1376 = vmatprep.subr.bf16.mxu0 0
        %1377 = vmatpush1.bf16.msra.mxu0 0
        %1378 = vmatprep.subr.bf16.mxu0 0
        %1379 = vmatpush1.bf16.msra.mxu0 0
        %1380 = vmatprep.subr.bf16.mxu0 0
        %1381 = vmatpush1.bf16.msra.mxu0 0
        %1382 = vmatprep.subr.bf16.mxu0 0
        %1383 = vmatpush1.bf16.msra.mxu0 0
        %1384 = vmatprep.subr.bf16.mxu0 0
        %1385 = vmatpush1.bf16.msra.mxu0 0
        %1386 = vmatprep.subr.bf16.mxu0 0
        %1387 = vmatpush1.bf16.msra.mxu0 0
        %1388 = vmatprep.subr.bf16.mxu0 0
        %1389 = vmatpush1.bf16.msra.mxu0 0
        %1390 = vmatprep.mubr.bf16.mxu0 0
        %1391 = vmatmul.mubr.bf16.gmra.mrb[0].mxu0 %v1289
        %v1392 = vpop.f32.mrb[0].mxu0
        %v1393 = vadd.f32 %v1309, %v1392
        %v1394 = vpop.f32.mrb[0].mxu0
        %v1395 = vpop.f32.mrb[0].mxu0
        %v1396 = vpop.f32.mrb[0].mxu0
        %1397 = vdwg.mxu0
        %v1398 = vadd.f32 %v1215, %v1393
        %v1399 = vsel %vm271, %v1398, 0.0
        %1400 = vadd.xlane.f32.xlu0 %v1399
        %v1401 = vpop.xlane.xlu0 %1400
        %v1402 = vmul.f32 %v1401, %v1195
        %v1403 = vsub.f32 %v1398, %v1402
        %v1404 = vmul.f32 %v1403, %v1403
        %v1405 = vsel %vm271, %v1404, 0.0
        %1406 = vadd.xlane.f32.xlu0 %v1405
        %v1407 = vpop.xlane.xlu0 %1406
        %v1408 = vmul.f32 %v1407, %v1195
        %v1409 = vadd.f32 %v1408, 1e-05
        %v1410 = vrsqrt.pop %v1409
        %v1411 = vmul.f32 %v1403, %v1410
        %v1412 = vlaneseq
        %v1413 = vshrl.u32 %v1412, 7
        %v1414 = vsub.s32 6, %v1413
        %v1415 = vrot.slane %v249, %v1414
        %v1416 = vmul.f32 %v1411, %v1415
        %v1417 = vlaneseq
        %v1418 = vshrl.u32 %v1417, 7
        %v1419 = vsub.s32 7, %v1418
        %v1420 = vrot.slane %v249, %v1419
        %v1421 = vadd.f32 %v1416, %v1420
        %1422 = vst.msk [vmem:[%s242] sm:$0xff] %vm271, %v1421
        %s1423 = sand.u32 %s159, 1
        %s1424 = scalar_lea.sflag [#allocation3], %s1423
        %s1425 = sand.u32 %s159, 1
        %s1426 = smul.addr %s1425, 8
        %s1427 = scalar_lea.vmem [#allocation2], %s1426
        // Predicated region
        $region45: #{tpu_custom_call.1} parent=43 // pred_check
          %p1428 = pneg %p169
        $region46: #{tpu_custom_call.1} parent=43 // pred_check_branch
          %1430 = sbr.rel (%p1428) target = $region48
        $region47: #{tpu_custom_call.1} parent=43 // pred_region
          %s1432 = ssub.s32 128, 128
          %1433 = vsyncadd %s1424, %s1432
          %s1434 = smul.addr %s20, 128
          %s1435 = scalar_lea.hbm %s6, %s1434
          %s1437 = sshll.u32 %s1427, 4
          %s1438 = int_to_ptr.vmem [resolvable:$true] %s1437
          %1440 = dma.vmem_to_hbm [thread:$0]  %s1438, 128, %s1435, %s1424
        $region48: #{tpu_custom_call.1} parent=43 // pred_fallthru
          _
      $region44: #{tpu_custom_call.1} parent=5 // pred_fallthru
        _
      %p1441 = scmp.le.s32.totalorder 2, %s15
      // Predicated region
      $region49: #{tpu_custom_call.1} parent=5 // pred_check
        %p1442 = pneg %p1441
      $region50: #{tpu_custom_call.1} parent=5 // pred_check_branch
        %1444 = sbr.rel (%p1442) target = $region52
      $region51: #{tpu_custom_call.1} parent=5 // pred_region
        %s1445 = ssub.s32 %s15, 2
        // Predicated region
        $region53: #{tpu_custom_call.1} parent=51 // pred_check
          %p1446 = pneg %p175
        $region54: #{tpu_custom_call.1} parent=51 // pred_check_branch
          %1448 = sbr.rel (%p1446) target = $region56
        $region55: #{tpu_custom_call.1} parent=51 // pred_region
          %s1449 = sand.u32 %s160, 1
          %s1450 = scalar_lea.sflag [#allocation3], %s1449
          %s1451 = sand.u32 %s160, 1
          %s1452 = smul.addr %s1451, 8
          %s1453 = scalar_lea.vmem [#allocation2], %s1452
          %1454 = dma.done %s1450, 128
        $region56: #{tpu_custom_call.1} parent=51 // pred_fallthru
          _
      $region52: #{tpu_custom_call.1} parent=5 // pred_fallthru
        _
    $region6: #{tpu_custom_call.1} parent=1 // loop_footer
      %s19 = sadd.s32 1, %s15
    $region7: #{tpu_custom_call.1} parent=1 // loop_footer_branch
      %14 = sbr.rel target = $region3
    $region8: #{tpu_custom_call.1} parent=1 // loop_exit
      _
    %1455 = vsyncpa [#allocation3], 1
    %s1456 = scalar_lea.sflag [#allocation3], 1
    %1457 = vsyncpa %s1456, 1

</llo_original>
